<compile_context>
chip_gen: v7x
topology: tpu7x:2x2x1
jax: 0.10.0
libtpu: 0.0.40
codegen_flags: <defaults>
</compile_context>

<pallas_src>
import functools

import jax
import jax.numpy as jnp
import numpy as np
from jax.experimental import pallas as pl
from jax.experimental.pallas import tpu as pltpu


def encoder_kernel(x_ref, w_ref, w2_ref, vec_ref, o_ref, *, n_heads, seq_len,
                   mm_dtype):
    """One grid step = one row tile holding `nb = T // seq_len` sequences.

    x_ref   : (T, D)             input rows (T = nb * seq_len)
    w_ref   : (D, 3D + D + hid)  [ Wqkv | Wo | W1 ]  in the matmul dtype
    w2_ref  : (hid, D)           W2 in the matmul dtype
    vec_ref : (8, VW) f32        packed LN params / biases
    o_ref   : (T, D)             output rows
    """
    eps = 1e-5
    f32 = jnp.float32
    T, D = x_ref.shape
    nb = T // seq_len
    Dh = D // n_heads
    hid = w2_ref.shape[0]
    approx_recip = mm_dtype != jnp.float32   # exact reciprocal on the f32 path

    x = x_ref[...].astype(f32)               # (T, D)   residual kept in f32
    w = w_ref[...]                           # (D, 4D+hid)  matmul dtype
    vec = vec_ref[...]                       # (8, VW)  f32

    # --- unpack parameter slabs (static slices) ---
    ln1_g = vec[0:1, 0:D]
    ln1_b = vec[1:2, 0:D]
    ln2_g = vec[2:3, 0:D]
    ln2_b = vec[3:4, 0:D]
    bo    = vec[4:5, 0:D]
    b2    = vec[5:6, 0:D]
    bqkv  = vec[6:7, 0:3 * D]
    b1    = vec[7:8, 0:hid]

    wqkv = w[:, 0:3 * D]                     # (D, 3D)
    wo   = w[:, 3 * D:4 * D]                 # (D, D)
    w1   = w[:, 4 * D:4 * D + hid]           # (D, hid)

    # ---- LayerNorm 1 (biased variance, eps=1e-5, like nn.LayerNorm) ----
    mu = jnp.mean(x, axis=-1, keepdims=True)
    var = jnp.mean((x - mu) ** 2, axis=-1, keepdims=True)
    xn = (x - mu) * jax.lax.rsqrt(var + eps) * ln1_g + ln1_b

    # ---- Fused Q/K/V projection: one wide MXU matmul, f32 accumulation ----
    qkv = jnp.dot(xn.astype(mm_dtype), wqkv,
                  preferred_element_type=f32) + bqkv            # (T, 3D) f32

    # ---- Attention: loop over heads only, batched over the nb sequences ----
    scale = 1.0 / (Dh ** 0.5)
    mha = jnp.zeros((T, D), f32)
    for h in range(n_heads):
        c0 = h * Dh
        qh = qkv[:, c0:c0 + Dh].reshape(nb, seq_len, Dh).astype(mm_dtype)
        kh = qkv[:, D + c0:D + c0 + Dh].reshape(nb, seq_len, Dh).astype(mm_dtype)
        vh = qkv[:, 2 * D + c0:2 * D + c0 + Dh].reshape(nb, seq_len, Dh).astype(mm_dtype)

        s = jnp.einsum('bqd,bkd->bqk', qh, kh,
                       preferred_element_type=f32) * scale      # (nb, S, S)
        s = s - jnp.max(s, axis=-1, keepdims=True)
        p = jnp.exp(s)
        denom = jnp.sum(p, axis=-1, keepdims=True)
        ctx = jnp.einsum('bqk,bkd->bqd', p.astype(mm_dtype), vh,
                         preferred_element_type=f32)            # (nb, S, Dh)
        # normalize the (smaller) context; EUP approx reciprocal on bf16 path
        ctx = ctx * pl.reciprocal(denom, approx=approx_recip)

        # Accumulate the output projection per head -> lane-dense (T, D);
        # no cat scratch / masked vst needed, live ranges bounded per head.
        mha = mha + jnp.dot(ctx.reshape(T, Dh).astype(mm_dtype),
                            wo[c0:c0 + Dh, :], preferred_element_type=f32)
    mha = mha + bo

    # ---- LayerNorm 2 ----
    mu2 = jnp.mean(mha, axis=-1, keepdims=True)
    var2 = jnp.mean((mha - mu2) ** 2, axis=-1, keepdims=True)
    xn2 = (mha - mu2) * jax.lax.rsqrt(var2 + eps) * ln2_g + ln2_b

    # ---- MLP: Linear -> exact GELU (erf) -> Linear ----
    h1 = jnp.dot(xn2.astype(mm_dtype), w1, preferred_element_type=f32) + b1
    h1 = 0.5 * h1 * (1.0 + jax.lax.erf(h1 * 0.7071067811865476))
    mlp = jnp.dot(h1.astype(mm_dtype), w2_ref[...],
                  preferred_element_type=f32) + b2

    # ---- Residual with the ORIGINAL input x ----
    o_ref[...] = (x + mlp).astype(o_ref.dtype)


def transformer_encoder_pallas(x, params, *, matmul_dtype=jnp.bfloat16,
                               batch_per_tile=None):
    B, S, D = x.shape
    H = params["wq_t"].shape[0]
    hid = params["w1_t"].shape[1]

    # ---- pack parameters into a few wide slabs (fewer, larger DMAs) ----
    def fuse_heads(wt):  # (H, D, Dh) -> (D, H*Dh): head h -> cols h*Dh:(h+1)*Dh
        return jnp.transpose(wt, (1, 0, 2)).reshape(D, D)

    wqkv = jnp.concatenate(
        [fuse_heads(params["wq_t"]), fuse_heads(params["wk_t"]),
         fuse_heads(params["wv_t"])], axis=1)                       # (D, 3D)
    bqkv = jnp.concatenate(
        [params["bq"].reshape(1, D), params["bk"].reshape(1, D),
         params["bv"].reshape(1, D)], axis=1)                       # (1, 3D)

    # Weight slabs stored in the matmul dtype (bf16 halves weight DMA + VMEM).
    w_pack = jnp.concatenate(
        [wqkv, params["wo_t"], params["w1_t"]],
        axis=1).astype(matmul_dtype)                                # (D, 4D+hid)
    w2 = params["w2_t"].astype(matmul_dtype)                        # (hid, D)

    # LN params / biases stay f32 (added after f32 accumulation).
    VW = max(3 * D, hid)
    vecs = jnp.zeros((8, VW), jnp.float32)
    rows = [params["ln1_g"], params["ln1_b"], params["ln2_g"], params["ln2_b"],
            params["bo"], params["b2"], bqkv, params["b1"]]
    for i, r in enumerate(rows):
        r = r.reshape(-1).astype(jnp.float32)
        vecs = vecs.at[i, :r.shape[0]].set(r)

    # ---- row tiling: each grid step processes `nb` whole sequences ----
    if batch_per_tile is None:
        batch_per_tile = min(B, max(1, -(-256 // S)))   # target ~>=256 rows/tile
        while B % batch_per_tile:
            batch_per_tile -= 1
    nb = batch_per_tile
    assert B % nb == 0, "batch_per_tile must divide the batch size"
    if (nb * S) % 8 != 0 and nb != B:
        nb = B        # keep the block equal to the full array (8-sublane rule)
    T = nb * S
    n_tiles = B // nb

    x2d = x.reshape(B * S, D)
    kern = functools.partial(encoder_kernel, n_heads=H, seq_len=S,
                             mm_dtype=matmul_dtype)

    out2d = pl.pallas_call(
        kern,
        out_shape=jax.ShapeDtypeStruct((B * S, D), x.dtype),
        grid=(n_tiles,),
        in_specs=[
            # activations: row-blocked, pipelined against compute
            pl.BlockSpec((T, D), lambda i: (i, 0)),
            # grid-invariant weight slabs (constant index_map -> fetched once).
            # TODO(synk): at production D/hid, single-buffer these with
            # pipeline_mode=pl.Buffered(1), set vmem_limit_bytes (v7x: 64 MiB
            # VMEM) and pad D/Dh to 128-lane multiples.
            pl.BlockSpec(w_pack.shape, lambda i: (0, 0)),
            pl.BlockSpec(w2.shape, lambda i: (0, 0)),
            pl.BlockSpec(vecs.shape, lambda i: (0, 0)),
        ],
        out_specs=pl.BlockSpec((T, D), lambda i: (i, 0)),
        compiler_params=pltpu.CompilerParams(
            dimension_semantics=("parallel",)),
    )(x2d, w_pack, w2, vecs)
    return out2d.reshape(B, S, D)


def transformer_encoder_ref(x, params):
    """Pure-JAX reference mirroring the PyTorch forward exactly."""
    eps = 1e-5

    def ln(v, g, b):
        mu = jnp.mean(v, -1, keepdims=True)
        var = jnp.mean((v - mu) ** 2, -1, keepdims=True)
        return (v - mu) / jnp.sqrt(var + eps) * g + b

    xn = ln(x, params["ln1_g"][0], params["ln1_b"][0])
    n_heads = params["wq_t"].shape[0]
    qkv = params["wq_t"].shape[2]
    heads = []
    for h in range(n_heads):
        q = xn @ params["wq_t"][h] + params["bq"][h, 0]
        k = xn @ params["wk_t"][h] + params["bk"][h, 0]
        v = xn @ params["wv_t"][h] + params["bv"][h, 0]
        att = (q @ jnp.swapaxes(k, -2, -1)) / (qkv ** 0.5)
        att = jax.nn.softmax(att, axis=-1)
        heads.append(att @ v)
    cat = jnp.concatenate(heads, axis=-1)
    mha = cat @ params["wo_t"] + params["bo"][0]
    xn2 = ln(mha, params["ln2_g"][0], params["ln2_b"][0])
    h1 = xn2 @ params["w1_t"] + params["b1"][0]
    h1 = 0.5 * h1 * (1.0 + jax.scipy.special.erf(h1 / jnp.sqrt(2.0)))
    mlp = h1 @ params["w2_t"] + params["b2"][0]
    return x + mlp


def init_params(key, d_model, n_heads, mlp_ratio=4):
    qkv = d_model // n_heads
    hid = d_model * mlp_ratio
    ks = jax.random.split(key, 12)
    s = 0.08
    f32 = jnp.float32
    p = {
        "ln1_g": jnp.ones((1, d_model), f32),
        "ln1_b": jnp.zeros((1, d_model), f32),
        # per-head Q/K/V weights stored pre-transposed: (n_heads, d_model, qkv)
        "wq_t": s * jax.random.normal(ks[0], (n_heads, d_model, qkv), f32),
        "bq":   s * jax.random.normal(ks[1], (n_heads, 1, qkv), f32),
        "wk_t": s * jax.random.normal(ks[2], (n_heads, d_model, qkv), f32),
        "bk":   s * jax.random.normal(ks[3], (n_heads, 1, qkv), f32),
        "wv_t": s * jax.random.normal(ks[4], (n_heads, d_model, qkv), f32),
        "bv":   s * jax.random.normal(ks[5], (n_heads, 1, qkv), f32),
        # output projection, pre-transposed: (d_model, d_model)
        "wo_t": s * jax.random.normal(ks[6], (d_model, d_model), f32),
        "bo":   s * jax.random.normal(ks[7], (1, d_model), f32),
        "ln2_g": jnp.ones((1, d_model), f32),
        "ln2_b": jnp.zeros((1, d_model), f32),
        # MLP weights, pre-transposed for (x @ W) form
        "w1_t": s * jax.random.normal(ks[8], (d_model, hid), f32),
        "b1":   s * jax.random.normal(ks[9], (1, hid), f32),
        "w2_t": s * jax.random.normal(ks[10], (hid, d_model), f32),
        "b2":   s * jax.random.normal(ks[11], (1, d_model), f32),
    }
    return p


if __name__ == "__main__":
    B, S, D, H = 2, 8, 32, 4  # batch, seq, d_model, n_heads  (qkv_dim = 8)
    key = jax.random.PRNGKey(0)
    kx, kp = jax.random.split(key)
    x = jax.random.normal(kx, (B, S, D), jnp.float32)
    params = init_params(kp, D, H, mlp_ratio=4)

    ref = transformer_encoder_ref(x, params)

    # 1) exact (f32 matmul) path, multi-tile grid: one sequence per grid step.
    out_f32 = transformer_encoder_pallas(x, params, matmul_dtype=jnp.float32,
                                         batch_per_tile=1)
    out_f32 = jax.block_until_ready(out_f32)
    np.testing.assert_allclose(np.asarray(out_f32), np.asarray(ref),
                               rtol=2e-5, atol=2e-5)

    # 2) fast path (default): bf16 matmul operands, f32 accumulation.
    out_bf16 = transformer_encoder_pallas(x, params)
    out_bf16 = jax.block_until_ready(out_bf16)
    np.testing.assert_allclose(np.asarray(out_bf16), np.asarray(ref),
                               rtol=3e-2, atol=3e-2)

    print("KERNEL_OK")
</pallas_src>

<mosaic_0001>
module attributes {stable_mosaic.version = 11 : i64} {
  func.func @encoder_kernel(%arg0: i32, %arg1: memref<8x32xf32, #tpu.memory_space<vmem>>, %arg2: memref<32x256xf32, #tpu.memory_space<vmem>>, %arg3: memref<128x32xf32, #tpu.memory_space<vmem>>, %arg4: memref<8x128xf32, #tpu.memory_space<vmem>>, %arg5: memref<8x32xf32, #tpu.memory_space<vmem>>) attributes {dimension_semantics = [#tpu.dimension_semantics<parallel>], iteration_bounds = array<i64: 2>, scalar_prefetch = 0 : i64, scratch_operands = 0 : i64, tpu.core_type = #tpu.core_type<tc>, window_params = [{transform_indices = @transform_0, window_bounds = array<i64: 8, 32>}, {pipeline_mode = #tpu.pipeline_mode<synchronous>, transform_indices = @transform_1, window_bounds = array<i64: 32, 256>}, {pipeline_mode = #tpu.pipeline_mode<synchronous>, transform_indices = @transform_2, window_bounds = array<i64: 128, 32>}, {pipeline_mode = #tpu.pipeline_mode<synchronous>, transform_indices = @transform_3, window_bounds = array<i64: 8, 128>}, {transform_indices = @transform_4, window_bounds = array<i64: 8, 32>}]} {
    %c0 = arith.constant 0 : index
    %c0_0 = arith.constant 0 : index
    %0 = vector.load %arg1[%c0, %c0_0] : memref<8x32xf32, #tpu.memory_space<vmem>>, vector<8x32xf32>
    %c0_1 = arith.constant 0 : index
    %c0_2 = arith.constant 0 : index
    %1 = vector.load %arg2[%c0_1, %c0_2] : memref<32x256xf32, #tpu.memory_space<vmem>>, vector<32x256xf32>
    %c0_3 = arith.constant 0 : index
    %c0_4 = arith.constant 0 : index
    %2 = vector.load %arg4[%c0_3, %c0_4] : memref<8x128xf32, #tpu.memory_space<vmem>>, vector<8x128xf32>
    %3 = vector.extract_strided_slice %2 {offsets = [0, 0], sizes = [1, 32], strides = [1, 1]} : vector<8x128xf32> to vector<1x32xf32>
    %4 = vector.extract_strided_slice %2 {offsets = [1, 0], sizes = [1, 32], strides = [1, 1]} : vector<8x128xf32> to vector<1x32xf32>
    %5 = vector.extract_strided_slice %2 {offsets = [2, 0], sizes = [1, 32], strides = [1, 1]} : vector<8x128xf32> to vector<1x32xf32>
    %6 = vector.extract_strided_slice %2 {offsets = [3, 0], sizes = [1, 32], strides = [1, 1]} : vector<8x128xf32> to vector<1x32xf32>
    %7 = vector.extract_strided_slice %2 {offsets = [4, 0], sizes = [1, 32], strides = [1, 1]} : vector<8x128xf32> to vector<1x32xf32>
    %8 = vector.extract_strided_slice %2 {offsets = [5, 0], sizes = [1, 32], strides = [1, 1]} : vector<8x128xf32> to vector<1x32xf32>
    %9 = vector.extract_strided_slice %2 {offsets = [6, 0], sizes = [1, 96], strides = [1, 1]} : vector<8x128xf32> to vector<1x96xf32>
    %10 = vector.extract_strided_slice %2 {offsets = [7, 0], sizes = [1, 128], strides = [1, 1]} : vector<8x128xf32> to vector<1x128xf32>
    %11 = vector.extract_strided_slice %1 {offsets = [0, 0], sizes = [32, 96], strides = [1, 1]} : vector<32x256xf32> to vector<32x96xf32>
    %12 = vector.extract_strided_slice %1 {offsets = [0, 96], sizes = [32, 32], strides = [1, 1]} : vector<32x256xf32> to vector<32x32xf32>
    %13 = vector.extract_strided_slice %1 {offsets = [0, 128], sizes = [32, 128], strides = [1, 1]} : vector<32x256xf32> to vector<32x128xf32>
    %cst = arith.constant dense<0.000000e+00> : vector<8xf32>
    %14 = vector.multi_reduction <add>, %0, %cst [1] : vector<8x32xf32> to vector<8xf32>
    %15 = vector.shape_cast %14 : vector<8xf32> to vector<8x1xf32>
    %cst_5 = arith.constant 3.200000e+01 : f32
    %16 = vector.broadcast %cst_5 : f32 to vector<8x1xf32>
    %17 = arith.divf %15, %16 : vector<8x1xf32>
    %18 = vector.broadcast %17 : vector<8x1xf32> to vector<8x32xf32>
    %19 = arith.subf %0, %18 : vector<8x32xf32>
    %20 = arith.mulf %19, %19 : vector<8x32xf32>
    %cst_6 = arith.constant dense<0.000000e+00> : vector<8xf32>
    %21 = vector.multi_reduction <add>, %20, %cst_6 [1] : vector<8x32xf32> to vector<8xf32>
    %22 = vector.shape_cast %21 : vector<8xf32> to vector<8x1xf32>
    %cst_7 = arith.constant 3.200000e+01 : f32
    %23 = vector.broadcast %cst_7 : f32 to vector<8x1xf32>
    %24 = arith.divf %22, %23 : vector<8x1xf32>
    %25 = vector.broadcast %17 : vector<8x1xf32> to vector<8x32xf32>
    %26 = arith.subf %0, %25 : vector<8x32xf32>
    %cst_8 = arith.constant 9.99999974E-6 : f32
    %27 = vector.broadcast %cst_8 : f32 to vector<8x1xf32>
    %28 = arith.addf %24, %27 : vector<8x1xf32>
    %29 = math.rsqrt %28 : vector<8x1xf32>
    %30 = vector.broadcast %29 : vector<8x1xf32> to vector<8x32xf32>
    %31 = arith.mulf %26, %30 : vector<8x32xf32>
    %32 = vector.broadcast %3 : vector<1x32xf32> to vector<8x32xf32>
    %33 = arith.mulf %31, %32 : vector<8x32xf32>
    %34 = vector.broadcast %4 : vector<1x32xf32> to vector<8x32xf32>
    %35 = arith.addf %33, %34 : vector<8x32xf32>
    %cst_9 = arith.constant dense<0.000000e+00> : vector<8x96xf32>
    %36 = tpu.matmul %35, %11, %cst_9 {dimension_numbers = #tpu.dot_dimension_numbers<[1], [0], [0], [1], [0, 0, 1, 1], [], []>} : vector<8x32xf32>, vector<32x96xf32>, vector<8x96xf32> -> vector<8x96xf32>
    %37 = vector.broadcast %9 : vector<1x96xf32> to vector<8x96xf32>
    %38 = arith.addf %36, %37 : vector<8x96xf32>
    %cst_10 = arith.constant 0.000000e+00 : f32
    %39 = vector.broadcast %cst_10 : f32 to vector<8x32xf32>
    %40 = vector.extract_strided_slice %38 {offsets = [0, 0], sizes = [8, 8], strides = [1, 1]} : vector<8x96xf32> to vector<8x8xf32>
    %41 = vector.shape_cast %40 : vector<8x8xf32> to vector<1x8x8xf32>
    %42 = vector.extract_strided_slice %38 {offsets = [0, 32], sizes = [8, 8], strides = [1, 1]} : vector<8x96xf32> to vector<8x8xf32>
    %43 = vector.shape_cast %42 : vector<8x8xf32> to vector<1x8x8xf32>
    %44 = vector.extract_strided_slice %38 {offsets = [0, 64], sizes = [8, 8], strides = [1, 1]} : vector<8x96xf32> to vector<8x8xf32>
    %45 = vector.shape_cast %44 : vector<8x8xf32> to vector<1x8x8xf32>
    "tpu.trace_start"() <{level = 10 : i32, message = "bqd,bkd->bqk"}> : () -> ()
    %cst_11 = arith.constant dense<0.000000e+00> : vector<1x8x8xf32>
    %46 = tpu.matmul %41, %43, %cst_11 {dimension_numbers = #tpu.dot_dimension_numbers<[2], [2], [1], [1], [0, 0, 0, 1, 1, 1], [0], [0]>} : vector<1x8x8xf32>, vector<1x8x8xf32>, vector<1x8x8xf32> -> vector<1x8x8xf32>
    "tpu.trace_stop"() : () -> ()
    %cst_12 = arith.constant 0.353553385 : f32
    %47 = vector.broadcast %cst_12 : f32 to vector<1x8x8xf32>
    %48 = arith.mulf %46, %47 : vector<1x8x8xf32>
    %cst_13 = arith.constant dense<0xFF800000> : vector<1x8xf32>
    %49 = vector.multi_reduction <maximumf>, %48, %cst_13 [2] : vector<1x8x8xf32> to vector<1x8xf32>
    %50 = vector.shape_cast %49 : vector<1x8xf32> to vector<1x8x1xf32>
    %51 = vector.broadcast %50 : vector<1x8x1xf32> to vector<1x8x8xf32>
    %52 = arith.subf %48, %51 : vector<1x8x8xf32>
    %53 = math.exp %52 : vector<1x8x8xf32>
    %cst_14 = arith.constant dense<0.000000e+00> : vector<1x8xf32>
    %54 = vector.multi_reduction <add>, %53, %cst_14 [2] : vector<1x8x8xf32> to vector<1x8xf32>
    %55 = vector.shape_cast %54 : vector<1x8xf32> to vector<1x8x1xf32>
    "tpu.trace_start"() <{level = 10 : i32, message = "bqk,bkd->bqd"}> : () -> ()
    %cst_15 = arith.constant dense<0.000000e+00> : vector<1x8x8xf32>
    %56 = tpu.matmul %53, %45, %cst_15 {dimension_numbers = #tpu.dot_dimension_numbers<[2], [1], [1], [2], [0, 0, 0, 1, 1, 2], [0], [0]>} : vector<1x8x8xf32>, vector<1x8x8xf32>, vector<1x8x8xf32> -> vector<1x8x8xf32>
    "tpu.trace_stop"() : () -> ()
    %57 = tpu.reciprocal %55 : vector<1x8x1xf32> -> vector<1x8x1xf32>
    %58 = vector.broadcast %57 : vector<1x8x1xf32> to vector<1x8x8xf32>
    %59 = arith.mulf %56, %58 : vector<1x8x8xf32>
    %60 = vector.shape_cast %59 : vector<1x8x8xf32> to vector<8x8xf32>
    %61 = vector.extract_strided_slice %12 {offsets = [0, 0], sizes = [8, 32], strides = [1, 1]} : vector<32x32xf32> to vector<8x32xf32>
    %cst_16 = arith.constant dense<0.000000e+00> : vector<8x32xf32>
    %62 = tpu.matmul %60, %61, %cst_16 {dimension_numbers = #tpu.dot_dimension_numbers<[1], [0], [0], [1], [0, 0, 1, 1], [], []>} : vector<8x8xf32>, vector<8x32xf32>, vector<8x32xf32> -> vector<8x32xf32>
    %63 = arith.addf %39, %62 : vector<8x32xf32>
    %64 = vector.extract_strided_slice %38 {offsets = [0, 8], sizes = [8, 8], strides = [1, 1]} : vector<8x96xf32> to vector<8x8xf32>
    %65 = vector.shape_cast %64 : vector<8x8xf32> to vector<1x8x8xf32>
    %66 = vector.extract_strided_slice %38 {offsets = [0, 40], sizes = [8, 8], strides = [1, 1]} : vector<8x96xf32> to vector<8x8xf32>
    %67 = vector.shape_cast %66 : vector<8x8xf32> to vector<1x8x8xf32>
    %68 = vector.extract_strided_slice %38 {offsets = [0, 72], sizes = [8, 8], strides = [1, 1]} : vector<8x96xf32> to vector<8x8xf32>
    %69 = vector.shape_cast %68 : vector<8x8xf32> to vector<1x8x8xf32>
    "tpu.trace_start"() <{level = 10 : i32, message = "bqd,bkd->bqk"}> : () -> ()
    %cst_17 = arith.constant dense<0.000000e+00> : vector<1x8x8xf32>
    %70 = tpu.matmul %65, %67, %cst_17 {dimension_numbers = #tpu.dot_dimension_numbers<[2], [2], [1], [1], [0, 0, 0, 1, 1, 1], [0], [0]>} : vector<1x8x8xf32>, vector<1x8x8xf32>, vector<1x8x8xf32> -> vector<1x8x8xf32>
    "tpu.trace_stop"() : () -> ()
    %cst_18 = arith.constant 0.353553385 : f32
    %71 = vector.broadcast %cst_18 : f32 to vector<1x8x8xf32>
    %72 = arith.mulf %70, %71 : vector<1x8x8xf32>
    %cst_19 = arith.constant dense<0xFF800000> : vector<1x8xf32>
    %73 = vector.multi_reduction <maximumf>, %72, %cst_19 [2] : vector<1x8x8xf32> to vector<1x8xf32>
    %74 = vector.shape_cast %73 : vector<1x8xf32> to vector<1x8x1xf32>
    %75 = vector.broadcast %74 : vector<1x8x1xf32> to vector<1x8x8xf32>
    %76 = arith.subf %72, %75 : vector<1x8x8xf32>
    %77 = math.exp %76 : vector<1x8x8xf32>
    %cst_20 = arith.constant dense<0.000000e+00> : vector<1x8xf32>
    %78 = vector.multi_reduction <add>, %77, %cst_20 [2] : vector<1x8x8xf32> to vector<1x8xf32>
    %79 = vector.shape_cast %78 : vector<1x8xf32> to vector<1x8x1xf32>
    "tpu.trace_start"() <{level = 10 : i32, message = "bqk,bkd->bqd"}> : () -> ()
    %cst_21 = arith.constant dense<0.000000e+00> : vector<1x8x8xf32>
    %80 = tpu.matmul %77, %69, %cst_21 {dimension_numbers = #tpu.dot_dimension_numbers<[2], [1], [1], [2], [0, 0, 0, 1, 1, 2], [0], [0]>} : vector<1x8x8xf32>, vector<1x8x8xf32>, vector<1x8x8xf32> -> vector<1x8x8xf32>
    "tpu.trace_stop"() : () -> ()
    %81 = tpu.reciprocal %79 : vector<1x8x1xf32> -> vector<1x8x1xf32>
    %82 = vector.broadcast %81 : vector<1x8x1xf32> to vector<1x8x8xf32>
    %83 = arith.mulf %80, %82 : vector<1x8x8xf32>
    %84 = vector.shape_cast %83 : vector<1x8x8xf32> to vector<8x8xf32>
    %85 = vector.extract_strided_slice %12 {offsets = [8, 0], sizes = [8, 32], strides = [1, 1]} : vector<32x32xf32> to vector<8x32xf32>
    %cst_22 = arith.constant dense<0.000000e+00> : vector<8x32xf32>
    %86 = tpu.matmul %84, %85, %cst_22 {dimension_numbers = #tpu.dot_dimension_numbers<[1], [0], [0], [1], [0, 0, 1, 1], [], []>} : vector<8x8xf32>, vector<8x32xf32>, vector<8x32xf32> -> vector<8x32xf32>
    %87 = arith.addf %63, %86 : vector<8x32xf32>
    %88 = vector.extract_strided_slice %38 {offsets = [0, 16], sizes = [8, 8], strides = [1, 1]} : vector<8x96xf32> to vector<8x8xf32>
    %89 = vector.shape_cast %88 : vector<8x8xf32> to vector<1x8x8xf32>
    %90 = vector.extract_strided_slice %38 {offsets = [0, 48], sizes = [8, 8], strides = [1, 1]} : vector<8x96xf32> to vector<8x8xf32>
    %91 = vector.shape_cast %90 : vector<8x8xf32> to vector<1x8x8xf32>
    %92 = vector.extract_strided_slice %38 {offsets = [0, 80], sizes = [8, 8], strides = [1, 1]} : vector<8x96xf32> to vector<8x8xf32>
    %93 = vector.shape_cast %92 : vector<8x8xf32> to vector<1x8x8xf32>
    "tpu.trace_start"() <{level = 10 : i32, message = "bqd,bkd->bqk"}> : () -> ()
    %cst_23 = arith.constant dense<0.000000e+00> : vector<1x8x8xf32>
    %94 = tpu.matmul %89, %91, %cst_23 {dimension_numbers = #tpu.dot_dimension_numbers<[2], [2], [1], [1], [0, 0, 0, 1, 1, 1], [0], [0]>} : vector<1x8x8xf32>, vector<1x8x8xf32>, vector<1x8x8xf32> -> vector<1x8x8xf32>
    "tpu.trace_stop"() : () -> ()
    %cst_24 = arith.constant 0.353553385 : f32
    %95 = vector.broadcast %cst_24 : f32 to vector<1x8x8xf32>
    %96 = arith.mulf %94, %95 : vector<1x8x8xf32>
    %cst_25 = arith.constant dense<0xFF800000> : vector<1x8xf32>
    %97 = vector.multi_reduction <maximumf>, %96, %cst_25 [2] : vector<1x8x8xf32> to vector<1x8xf32>
    %98 = vector.shape_cast %97 : vector<1x8xf32> to vector<1x8x1xf32>
    %99 = vector.broadcast %98 : vector<1x8x1xf32> to vector<1x8x8xf32>
    %100 = arith.subf %96, %99 : vector<1x8x8xf32>
    %101 = math.exp %100 : vector<1x8x8xf32>
    %cst_26 = arith.constant dense<0.000000e+00> : vector<1x8xf32>
    %102 = vector.multi_reduction <add>, %101, %cst_26 [2] : vector<1x8x8xf32> to vector<1x8xf32>
    %103 = vector.shape_cast %102 : vector<1x8xf32> to vector<1x8x1xf32>
    "tpu.trace_start"() <{level = 10 : i32, message = "bqk,bkd->bqd"}> : () -> ()
    %cst_27 = arith.constant dense<0.000000e+00> : vector<1x8x8xf32>
    %104 = tpu.matmul %101, %93, %cst_27 {dimension_numbers = #tpu.dot_dimension_numbers<[2], [1], [1], [2], [0, 0, 0, 1, 1, 2], [0], [0]>} : vector<1x8x8xf32>, vector<1x8x8xf32>, vector<1x8x8xf32> -> vector<1x8x8xf32>
    "tpu.trace_stop"() : () -> ()
    %105 = tpu.reciprocal %103 : vector<1x8x1xf32> -> vector<1x8x1xf32>
    %106 = vector.broadcast %105 : vector<1x8x1xf32> to vector<1x8x8xf32>
    %107 = arith.mulf %104, %106 : vector<1x8x8xf32>
    %108 = vector.shape_cast %107 : vector<1x8x8xf32> to vector<8x8xf32>
    %109 = vector.extract_strided_slice %12 {offsets = [16, 0], sizes = [8, 32], strides = [1, 1]} : vector<32x32xf32> to vector<8x32xf32>
    %cst_28 = arith.constant dense<0.000000e+00> : vector<8x32xf32>
    %110 = tpu.matmul %108, %109, %cst_28 {dimension_numbers = #tpu.dot_dimension_numbers<[1], [0], [0], [1], [0, 0, 1, 1], [], []>} : vector<8x8xf32>, vector<8x32xf32>, vector<8x32xf32> -> vector<8x32xf32>
    %111 = arith.addf %87, %110 : vector<8x32xf32>
    %112 = vector.extract_strided_slice %38 {offsets = [0, 24], sizes = [8, 8], strides = [1, 1]} : vector<8x96xf32> to vector<8x8xf32>
    %113 = vector.shape_cast %112 : vector<8x8xf32> to vector<1x8x8xf32>
    %114 = vector.extract_strided_slice %38 {offsets = [0, 56], sizes = [8, 8], strides = [1, 1]} : vector<8x96xf32> to vector<8x8xf32>
    %115 = vector.shape_cast %114 : vector<8x8xf32> to vector<1x8x8xf32>
    %116 = vector.extract_strided_slice %38 {offsets = [0, 88], sizes = [8, 8], strides = [1, 1]} : vector<8x96xf32> to vector<8x8xf32>
    %117 = vector.shape_cast %116 : vector<8x8xf32> to vector<1x8x8xf32>
    "tpu.trace_start"() <{level = 10 : i32, message = "bqd,bkd->bqk"}> : () -> ()
    %cst_29 = arith.constant dense<0.000000e+00> : vector<1x8x8xf32>
    %118 = tpu.matmul %113, %115, %cst_29 {dimension_numbers = #tpu.dot_dimension_numbers<[2], [2], [1], [1], [0, 0, 0, 1, 1, 1], [0], [0]>} : vector<1x8x8xf32>, vector<1x8x8xf32>, vector<1x8x8xf32> -> vector<1x8x8xf32>
    "tpu.trace_stop"() : () -> ()
    %cst_30 = arith.constant 0.353553385 : f32
    %119 = vector.broadcast %cst_30 : f32 to vector<1x8x8xf32>
    %120 = arith.mulf %118, %119 : vector<1x8x8xf32>
    %cst_31 = arith.constant dense<0xFF800000> : vector<1x8xf32>
    %121 = vector.multi_reduction <maximumf>, %120, %cst_31 [2] : vector<1x8x8xf32> to vector<1x8xf32>
    %122 = vector.shape_cast %121 : vector<1x8xf32> to vector<1x8x1xf32>
    %123 = vector.broadcast %122 : vector<1x8x1xf32> to vector<1x8x8xf32>
    %124 = arith.subf %120, %123 : vector<1x8x8xf32>
    %125 = math.exp %124 : vector<1x8x8xf32>
    %cst_32 = arith.constant dense<0.000000e+00> : vector<1x8xf32>
    %126 = vector.multi_reduction <add>, %125, %cst_32 [2] : vector<1x8x8xf32> to vector<1x8xf32>
    %127 = vector.shape_cast %126 : vector<1x8xf32> to vector<1x8x1xf32>
    "tpu.trace_start"() <{level = 10 : i32, message = "bqk,bkd->bqd"}> : () -> ()
    %cst_33 = arith.constant dense<0.000000e+00> : vector<1x8x8xf32>
    %128 = tpu.matmul %125, %117, %cst_33 {dimension_numbers = #tpu.dot_dimension_numbers<[2], [1], [1], [2], [0, 0, 0, 1, 1, 2], [0], [0]>} : vector<1x8x8xf32>, vector<1x8x8xf32>, vector<1x8x8xf32> -> vector<1x8x8xf32>
    "tpu.trace_stop"() : () -> ()
    %129 = tpu.reciprocal %127 : vector<1x8x1xf32> -> vector<1x8x1xf32>
    %130 = vector.broadcast %129 : vector<1x8x1xf32> to vector<1x8x8xf32>
    %131 = arith.mulf %128, %130 : vector<1x8x8xf32>
    %132 = vector.shape_cast %131 : vector<1x8x8xf32> to vector<8x8xf32>
    %133 = vector.extract_strided_slice %12 {offsets = [24, 0], sizes = [8, 32], strides = [1, 1]} : vector<32x32xf32> to vector<8x32xf32>
    %cst_34 = arith.constant dense<0.000000e+00> : vector<8x32xf32>
    %134 = tpu.matmul %132, %133, %cst_34 {dimension_numbers = #tpu.dot_dimension_numbers<[1], [0], [0], [1], [0, 0, 1, 1], [], []>} : vector<8x8xf32>, vector<8x32xf32>, vector<8x32xf32> -> vector<8x32xf32>
    %135 = arith.addf %111, %134 : vector<8x32xf32>
    %136 = vector.broadcast %7 : vector<1x32xf32> to vector<8x32xf32>
    %137 = arith.addf %135, %136 : vector<8x32xf32>
    %cst_35 = arith.constant dense<0.000000e+00> : vector<8xf32>
    %138 = vector.multi_reduction <add>, %137, %cst_35 [1] : vector<8x32xf32> to vector<8xf32>
    %139 = vector.shape_cast %138 : vector<8xf32> to vector<8x1xf32>
    %cst_36 = arith.constant 3.200000e+01 : f32
    %140 = vector.broadcast %cst_36 : f32 to vector<8x1xf32>
    %141 = arith.divf %139, %140 : vector<8x1xf32>
    %142 = vector.broadcast %141 : vector<8x1xf32> to vector<8x32xf32>
    %143 = arith.subf %137, %142 : vector<8x32xf32>
    %144 = arith.mulf %143, %143 : vector<8x32xf32>
    %cst_37 = arith.constant dense<0.000000e+00> : vector<8xf32>
    %145 = vector.multi_reduction <add>, %144, %cst_37 [1] : vector<8x32xf32> to vector<8xf32>
    %146 = vector.shape_cast %145 : vector<8xf32> to vector<8x1xf32>
    %cst_38 = arith.constant 3.200000e+01 : f32
    %147 = vector.broadcast %cst_38 : f32 to vector<8x1xf32>
    %148 = arith.divf %146, %147 : vector<8x1xf32>
    %149 = vector.broadcast %141 : vector<8x1xf32> to vector<8x32xf32>
    %150 = arith.subf %137, %149 : vector<8x32xf32>
    %cst_39 = arith.constant 9.99999974E-6 : f32
    %151 = vector.broadcast %cst_39 : f32 to vector<8x1xf32>
    %152 = arith.addf %148, %151 : vector<8x1xf32>
    %153 = math.rsqrt %152 : vector<8x1xf32>
    %154 = vector.broadcast %153 : vector<8x1xf32> to vector<8x32xf32>
    %155 = arith.mulf %150, %154 : vector<8x32xf32>
    %156 = vector.broadcast %5 : vector<1x32xf32> to vector<8x32xf32>
    %157 = arith.mulf %155, %156 : vector<8x32xf32>
    %158 = vector.broadcast %6 : vector<1x32xf32> to vector<8x32xf32>
    %159 = arith.addf %157, %158 : vector<8x32xf32>
    %cst_40 = arith.constant dense<0.000000e+00> : vector<8x128xf32>
    %160 = tpu.matmul %159, %13, %cst_40 {dimension_numbers = #tpu.dot_dimension_numbers<[1], [0], [0], [1], [0, 0, 1, 1], [], []>} : vector<8x32xf32>, vector<32x128xf32>, vector<8x128xf32> -> vector<8x128xf32>
    %161 = vector.broadcast %10 : vector<1x128xf32> to vector<8x128xf32>
    %162 = arith.addf %160, %161 : vector<8x128xf32>
    %cst_41 = arith.constant 5.000000e-01 : f32
    %163 = vector.broadcast %cst_41 : f32 to vector<8x128xf32>
    %164 = arith.mulf %163, %162 : vector<8x128xf32>
    %cst_42 = arith.constant 0.707106769 : f32
    %165 = vector.broadcast %cst_42 : f32 to vector<8x128xf32>
    %166 = arith.mulf %162, %165 : vector<8x128xf32>
    %167 = math.erf %166 : vector<8x128xf32>
    %cst_43 = arith.constant 1.000000e+00 : f32
    %168 = vector.broadcast %cst_43 : f32 to vector<8x128xf32>
    %169 = arith.addf %168, %167 : vector<8x128xf32>
    %170 = arith.mulf %164, %169 : vector<8x128xf32>
    %c0_44 = arith.constant 0 : index
    %c0_45 = arith.constant 0 : index
    %171 = vector.load %arg3[%c0_44, %c0_45] : memref<128x32xf32, #tpu.memory_space<vmem>>, vector<128x32xf32>
    %cst_46 = arith.constant dense<0.000000e+00> : vector<8x32xf32>
    %172 = tpu.matmul %170, %171, %cst_46 {dimension_numbers = #tpu.dot_dimension_numbers<[1], [0], [0], [1], [0, 0, 1, 1], [], []>} : vector<8x128xf32>, vector<128x32xf32>, vector<8x32xf32> -> vector<8x32xf32>
    %173 = vector.broadcast %8 : vector<1x32xf32> to vector<8x32xf32>
    %174 = arith.addf %172, %173 : vector<8x32xf32>
    %175 = arith.addf %0, %174 : vector<8x32xf32>
    %c0_47 = arith.constant 0 : index
    %c0_48 = arith.constant 0 : index
    %176 = vector.load %arg5[%c0_47, %c0_48] : memref<8x32xf32, #tpu.memory_space<vmem>>, vector<8x32xf32>
    tpu.vector_store %arg5[%c0_47, %c0_48], %175 {strides = array<i32>} : memref<8x32xf32, #tpu.memory_space<vmem>>, vector<8x32xf32>,
    return
  }
  func.func @transform_0(%arg0: i32) -> (i32, i32) {
    %c0_i32 = arith.constant 0 : i32
    %c0_i32_0 = arith.constant 0 : i32
    return %arg0, %c0_i32 : i32, i32
  }
  func.func @transform_1(%arg0: i32) -> (i32, i32) {
    %c0_i32 = arith.constant 0 : i32
    %c0_i32_0 = arith.constant 0 : i32
    %c0_i32_1 = arith.constant 0 : i32
    return %c0_i32, %c0_i32_0 : i32, i32
  }
  func.func @transform_2(%arg0: i32) -> (i32, i32) {
    %c0_i32 = arith.constant 0 : i32
    %c0_i32_0 = arith.constant 0 : i32
    %c0_i32_1 = arith.constant 0 : i32
    return %c0_i32, %c0_i32_0 : i32, i32
  }
  func.func @transform_3(%arg0: i32) -> (i32, i32) {
    %c0_i32 = arith.constant 0 : i32
    %c0_i32_0 = arith.constant 0 : i32
    %c0_i32_1 = arith.constant 0 : i32
    return %c0_i32, %c0_i32_0 : i32, i32
  }
  func.func @transform_4(%arg0: i32) -> (i32, i32) {
    %c0_i32 = arith.constant 0 : i32
    %c0_i32_0 = arith.constant 0 : i32
    return %arg0, %c0_i32 : i32, i32
  }
}

</mosaic_0001>

<llo_original>
// kernel: tpu_custom_call.1
$region0: #{tpu_custom_call.1}
  #allocation0 [shape = 'u32[]', space=smem, size = 0x4, offset = 0x4, fixed_abs, tag = 'smem constant byte address 0x4 - core index']
  #allocation1 [shape = 'u32[144,128]{1,0:T(1,128)}', space=vmem, size = 0x12000, scoped, tag = 'internal scratch']
  %s0 = inlined_call_operand.vmem [shape: f32[16,32], index: 0, kind: input, shape index: {}]
  %s1 = inlined_call_operand.vmem [shape: f32[32,256], index: 1, kind: input, shape index: {}]
  %s2 = inlined_call_operand.vmem [shape: f32[128,32], index: 2, kind: input, shape index: {}]
  %s3 = inlined_call_operand.vmem [shape: f32[8,128], index: 3, kind: input, shape index: {}]
  %s4 = inlined_call_operand.hbm [shape: f32[16,32], index: 4, kind: output, shape index: {}]
  %s5 = sld [smem:[#allocation0]]
  $region49: #{tpu_custom_call.1} parent=0
    _
  %s7 = ssub.s32 1, %s5
  %s8 = scalar_select 0, %s7, %s5
  $region1: #{tpu_custom_call.1} parent=0
    #allocation2 [shape = 'u8[8192]{0}', space=vmem, size = 0x2000, scoped, tag = 'output window, operand 0']
    #allocation3 [shape = 's32[2]{0}', space=sflag, size = 0x8, scoped, tag = 'scoped memory for tpu_custom_call.1']
    %9 = vsyncpa [#allocation3], 0
    %s10 = scalar_lea.sflag [#allocation3], 1
    %11 = vsyncpa %s10, 0
    loop: start=0, step=1, limit=4
    $region2: #{tpu_custom_call.1} parent=1 // loop_pre_header
      _
    $region3: #{tpu_custom_call.1} parent=1 // loop_header
      %s13 = sphi 0, %s17
      %p14 = scmp.ge.s32.totalorder %s13, 4
      %s23 = sphi 0, %s25
      %s26 = sphi 0, %s23
      %s27 = sphi 0, %s26
      %s43 = sphi 0, %s27
      %s47 = sphi 0, %s47
      %s49 = sphi 0, %s47
      %s50 = sphi 0, %s49
      %s64 = sphi 0, %s50
      %s68 = sphi 0, %s68
      %s70 = sphi 0, %s68
      %s71 = sphi 0, %s70
      %s85 = sphi 0, %s71
      %s89 = sphi 0, %s89
      %s91 = sphi 0, %s89
      %s92 = sphi 0, %s91
      %s106 = sphi 0, %s92
      %s112 = sphi 0, %s114
      %s115 = sphi 0, %s112
      %s116 = sphi 0, %s115
      %s132 = sphi 0, %s116
    $region4: #{tpu_custom_call.1} parent=1 // loop_header_branch
      %16 = sbr.rel (%p14) target = $region8
    $region5: #{tpu_custom_call.1} parent=1 // loop_body
      %s18 = ssub.s32 %s13, 1
      %s19 = ssub.s32 %s13, 2
      %s20 = sadd.s32 %s13, 1
      %s21 = ssub.s32 %s13, %s20
      %p22 = scmp.eq.s32.totalorder %s21, 0
      %s24 = sadd.s32 %s23, 1
      %s25 = scalar_select %p22, %s23, %s24
      %p28 = pneg %p22
      %p29 = scmp.eq.s32.totalorder %s13, 1
      %p30 = por %p28, %p29
      %p31 = scmp.ne.s32.totalorder %s23, %s26
      %p32 = scmp.eq.s32.totalorder %s13, 0
      %p33 = por %p31, %p32
      %p34 = scmp.ne.s32.totalorder %s23, %s26
      %p35 = scmp.eq.s32.totalorder %s18, 1
      %p36 = por %p34, %p35
      %p37 = scmp.ne.s32.totalorder %s26, %s27
      %p38 = scmp.eq.s32.totalorder %s18, 0
      %p39 = por %p37, %p38
      %p40 = scmp.ne.s32.totalorder %s26, %s27
      %p41 = scmp.eq.s32.totalorder %s19, 1
      %p42 = por %p40, %p41
      %p44 = scmp.ne.s32.totalorder %s27, %s43
      %p45 = scmp.eq.s32.totalorder %s19, 0
      %p46 = por %p44, %p45
      %s48 = sadd.s32 %s47, 1
      %p51 = scmp.eq.s32.totalorder %s13, 1
      %p52 = scmp.ne.s32.totalorder %s47, %s49
      %p53 = scmp.eq.s32.totalorder %s13, 0
      %p54 = por %p52, %p53
      %p55 = scmp.ne.s32.totalorder %s47, %s49
      %p56 = scmp.eq.s32.totalorder %s18, 1
      %p57 = por %p55, %p56
      %p58 = scmp.ne.s32.totalorder %s49, %s50
      %p59 = scmp.eq.s32.totalorder %s18, 0
      %p60 = por %p58, %p59
      %p61 = scmp.ne.s32.totalorder %s49, %s50
      %p62 = scmp.eq.s32.totalorder %s19, 1
      %p63 = por %p61, %p62
      %p65 = scmp.ne.s32.totalorder %s50, %s64
      %p66 = scmp.eq.s32.totalorder %s19, 0
      %p67 = por %p65, %p66
      %s69 = sadd.s32 %s68, 1
      %p72 = scmp.eq.s32.totalorder %s13, 1
      %p73 = scmp.ne.s32.totalorder %s68, %s70
      %p74 = scmp.eq.s32.totalorder %s13, 0
      %p75 = por %p73, %p74
      %p76 = scmp.ne.s32.totalorder %s68, %s70
      %p77 = scmp.eq.s32.totalorder %s18, 1
      %p78 = por %p76, %p77
      %p79 = scmp.ne.s32.totalorder %s70, %s71
      %p80 = scmp.eq.s32.totalorder %s18, 0
      %p81 = por %p79, %p80
      %p82 = scmp.ne.s32.totalorder %s70, %s71
      %p83 = scmp.eq.s32.totalorder %s19, 1
      %p84 = por %p82, %p83
      %p86 = scmp.ne.s32.totalorder %s71, %s85
      %p87 = scmp.eq.s32.totalorder %s19, 0
      %p88 = por %p86, %p87
      %s90 = sadd.s32 %s89, 1
      %p93 = scmp.eq.s32.totalorder %s13, 1
      %p94 = scmp.ne.s32.totalorder %s89, %s91
      %p95 = scmp.eq.s32.totalorder %s13, 0
      %p96 = por %p94, %p95
      %p97 = scmp.ne.s32.totalorder %s89, %s91
      %p98 = scmp.eq.s32.totalorder %s18, 1
      %p99 = por %p97, %p98
      %p100 = scmp.ne.s32.totalorder %s91, %s92
      %p101 = scmp.eq.s32.totalorder %s18, 0
      %p102 = por %p100, %p101
      %p103 = scmp.ne.s32.totalorder %s91, %s92
      %p104 = scmp.eq.s32.totalorder %s19, 1
      %p105 = por %p103, %p104
      %p107 = scmp.ne.s32.totalorder %s92, %s106
      %p108 = scmp.eq.s32.totalorder %s19, 0
      %p109 = por %p107, %p108
      %s110 = ssub.s32 %s13, %s20
      %p111 = scmp.eq.s32.totalorder %s110, 0
      %s113 = sadd.s32 %s112, 1
      %s114 = scalar_select %p111, %s112, %s113
      %p117 = pneg %p111
      %p118 = scmp.eq.s32.totalorder %s13, 1
      %p119 = por %p117, %p118
      %p120 = scmp.ne.s32.totalorder %s112, %s115
      %p121 = scmp.eq.s32.totalorder %s13, 0
      %p122 = por %p120, %p121
      %p123 = scmp.ne.s32.totalorder %s112, %s115
      %p124 = scmp.eq.s32.totalorder %s18, 1
      %p125 = por %p123, %p124
      %p126 = scmp.ne.s32.totalorder %s115, %s116
      %p127 = scmp.eq.s32.totalorder %s18, 0
      %p128 = por %p126, %p127
      %p129 = scmp.ne.s32.totalorder %s115, %s116
      %p130 = scmp.eq.s32.totalorder %s19, 1
      %p131 = por %p129, %p130
      %p133 = scmp.ne.s32.totalorder %s116, %s132
      %p134 = scmp.eq.s32.totalorder %s19, 0
      %p135 = por %p133, %p134
      %p136 = scmp.le.s32.totalorder 1, %s13
      %p137 = scmp.lt.s32.totalorder %s13, 3
      %p138 = pnand %p136, %p137
      %p139 = pneg %p138
      // Predicated region
      $region9: #{tpu_custom_call.1} parent=5 // pred_check
        _
      $region10: #{tpu_custom_call.1} parent=5 // pred_check_branch
        %141 = sbr.rel (%p138) target = $region12
      $region11: #{tpu_custom_call.1} parent=5 // pred_region
        %s142 = ssub.s32 %s13, 1
        // Predicated region
        $region13: #{tpu_custom_call.1} parent=11 // pred_check
          %p143 = pneg %p60
        $region14: #{tpu_custom_call.1} parent=11 // pred_check_branch
          %145 = sbr.rel (%p143) target = $region16
        $region15: #{tpu_custom_call.1} parent=11 // pred_region
          _
        $region16: #{tpu_custom_call.1} parent=11 // pred_fallthru
          _
        // Predicated region
        $region17: #{tpu_custom_call.1} parent=11 // pred_check
          %p146 = pneg %p81
        $region18: #{tpu_custom_call.1} parent=11 // pred_check_branch
          %148 = sbr.rel (%p146) target = $region20
        $region19: #{tpu_custom_call.1} parent=11 // pred_region
          _
        $region20: #{tpu_custom_call.1} parent=11 // pred_fallthru
          _
        // Predicated region
        $region21: #{tpu_custom_call.1} parent=11 // pred_check
          %p149 = pneg %p102
        $region22: #{tpu_custom_call.1} parent=11 // pred_check_branch
          %151 = sbr.rel (%p149) target = $region24
        $region23: #{tpu_custom_call.1} parent=11 // pred_region
          _
        $region24: #{tpu_custom_call.1} parent=11 // pred_fallthru
          _
      $region12: #{tpu_custom_call.1} parent=5 // pred_fallthru
        _
      %p152 = scmp.lt.s32.totalorder %s13, 2
      // Predicated region
      $region25: #{tpu_custom_call.1} parent=5 // pred_check
        %p153 = pneg %p152
      $region26: #{tpu_custom_call.1} parent=5 // pred_check_branch
        %155 = sbr.rel (%p153) target = $region28
      $region27: #{tpu_custom_call.1} parent=5 // pred_region
        // Predicated region
        $region29: #{tpu_custom_call.1} parent=27 // pred_check
          %p156 = pneg %p33
        $region30: #{tpu_custom_call.1} parent=27 // pred_check_branch
          %158 = sbr.rel (%p156) target = $region32
        $region31: #{tpu_custom_call.1} parent=27 // pred_region
          %p159 = scmp.lt.s32.totalorder %s13, 1
          %s160 = scalar_select %p159, %s13, 1
          %s161 = smul.addr %s160, 8
          %s162 = scalar_lea.vmem %s0, %s161
        $region32: #{tpu_custom_call.1} parent=27 // pred_fallthru
          _
      $region28: #{tpu_custom_call.1} parent=5 // pred_fallthru
        _
      %p163 = scmp.le.s32.totalorder 1, %s13
      %p164 = scmp.lt.s32.totalorder %s13, 3
      %p165 = pnand %p163, %p164
      %p166 = pneg %p165
      // Predicated region
      $region33: #{tpu_custom_call.1} parent=5 // pred_check
        _
      $region34: #{tpu_custom_call.1} parent=5 // pred_check_branch
        %168 = sbr.rel (%p165) target = $region36
      $region35: #{tpu_custom_call.1} parent=5 // pred_region
        %s169 = ssub.s32 %s13, 1
        %p170 = scmp.lt.s32.totalorder %s18, 1
        %s171 = scalar_select %p170, %s18, 1
        %s172 = smul.addr %s171, 8
        %s173 = scalar_lea.vmem %s0, %s172
        %p174 = pneg %p39
        %p175 = pneg %p36
        %p176 = pneg %p60
        %p177 = pneg %p57
        %p178 = pneg %p81
        %p179 = pneg %p78
        %p180 = pneg %p102
        %p181 = pneg %p99
        %p182 = pneg %p128
        %p183 = pneg %p125
        %s184 = sand.u32 %s115, 1
        %s185 = scalar_lea.sflag [#allocation3], %s184
        %s186 = sand.u32 %s115, 1
        %s187 = smul.addr %s186, 8
        %s188 = scalar_lea.vmem [#allocation2], %s187
        %p189 = scmp.lt.s32.totalorder %s18, 1
        %s190 = scalar_select %p189, %s18, 1
        %s191 = smul.addr %s190, 8
        %s192 = scalar_lea.vmem %s0, %s191
        %v193 = vld [vmem:[%s192] sm:$0xff]
        %v194 = vld [vmem:[%s1] sm:$0xff]
        %v195 = vld [vmem:[%s1 + $0x8] sm:$0xff]
        %v196 = vld [vmem:[%s1 + $0x10] sm:$0xff]
        %v197 = vld [vmem:[%s1 + $0x18] sm:$0xff]
        %v198 = vld [vmem:[%s1 + $0x20] sm:$0xff]
        %v199 = vld [vmem:[%s1 + $0x28] sm:$0xff]
        %v200 = vld [vmem:[%s1 + $0x30] sm:$0xff]
        %v201 = vld [vmem:[%s1 + $0x38] sm:$0xff]
        %v202 = vld [vmem:[%s3] sm:$0xff]
        %vm203 = vcmask 261120
        %v204 = vsel %vm203, %v193, 0.0
        %205 = vadd.xlane.f32.xlu0 %v204
        %v206 = vpop.xlane.xlu0 %205
        %v207 = vrcp.pop 32.0
        %v208 = vmul.f32 %v206, %v207
        %v209 = vsub.f32 %v193, %v208
        %v210 = vmul.f32 %v209, %v209
        %v211 = vsel %vm203, %v210, 0.0
        %212 = vadd.xlane.f32.xlu0 %v211
        %v213 = vpop.xlane.xlu0 %212
        %v214 = vmul.f32 %v213, %v207
        %v215 = vadd.f32 %v214, 1e-05
        %v216 = vrsqrt.pop %v215
        %v217 = vmul.f32 %v209, %v216
        %v218 = vlaneseq
        %v219 = vshrl.u32 %v218, 7
        %v220 = vsub.s32 0, %v219
        %v221 = vrot.slane %v202, %v220
        %v222 = vmul.f32 %v217, %v221
        %v223 = vlaneseq
        %v224 = vshrl.u32 %v223, 7
        %v225 = vsub.s32 1, %v224
        %v226 = vrot.slane %v202, %v225
        %v227 = vadd.f32 %v222, %v226
        %v228 = vlaneseq
        %v229 = vshrl.u32 %v228, 7
        %v230 = vsub.s32 6, %v229
        %v231 = vrot.slane %v202, %v230
        %v233 = vsel %vm203, %v227, 0
        %235 = vmatprep.subr.mxu0 0.0
        %236 = vmatpush1.msra.mxu0 %v194
        %237 = vmatprep.subr.mxu0 0.0
        %238 = vmatpush1.msra.mxu0 %v196
        %239 = vmatprep.subr.mxu0 0.0
        %240 = vmatpush1.msra.mxu0 %v198
        %241 = vmatprep.subr.mxu0 0.0
        %242 = vmatpush1.msra.mxu0 %v200
        %243 = vmatprep.subr.mxu0 0.0
        %244 = vmatpush1.msra.mxu0 0.0
        %245 = vmatprep.subr.mxu0 0.0
        %246 = vmatpush1.msra.mxu0 0.0
        %247 = vmatprep.subr.mxu0 0.0
        %248 = vmatpush1.msra.mxu0 0.0
        %249 = vmatprep.subr.mxu0 0.0
        %250 = vmatpush1.msra.mxu0 0.0
        %251 = vmatprep.subr.mxu0 0.0
        %252 = vmatpush1.msra.mxu0 0.0
        %253 = vmatprep.subr.mxu0 0.0
        %254 = vmatpush1.msra.mxu0 0.0
        %255 = vmatprep.subr.mxu0 0.0
        %256 = vmatpush1.msra.mxu0 0.0
        %257 = vmatprep.subr.mxu0 0.0
        %258 = vmatpush1.msra.mxu0 0.0
        %259 = vmatprep.subr.mxu0 0.0
        %260 = vmatpush1.msra.mxu0 0.0
        %261 = vmatprep.subr.mxu0 0.0
        %262 = vmatpush1.msra.mxu0 0.0
        %263 = vmatprep.subr.mxu0 0.0
        %264 = vmatpush1.msra.mxu0 0.0
        %265 = vmatprep.subr.mxu0 0.0
        %266 = vmatpush1.msra.mxu0 0.0
        %267 = vmatprep.subr.mxu0 0.0
        %268 = vmatpush1.msra.mxu0 0.0
        %269 = vmatprep.subr.mxu0 0.0
        %270 = vmatpush1.msra.mxu0 0.0
        %271 = vmatprep.subr.mxu0 0.0
        %272 = vmatpush1.msra.mxu0 0.0
        %273 = vmatprep.subr.mxu0 0.0
        %274 = vmatpush1.msra.mxu0 0.0
        %275 = vmatprep.subr.mxu0 0.0
        %276 = vmatpush1.msra.mxu0 0.0
        %277 = vmatprep.subr.mxu0 0.0
        %278 = vmatpush1.msra.mxu0 0.0
        %279 = vmatprep.subr.mxu0 0.0
        %280 = vmatpush1.msra.mxu0 0.0
        %281 = vmatprep.subr.mxu0 0.0
        %282 = vmatpush1.msra.mxu0 0.0
        %283 = vmatprep.subr.mxu0 0.0
        %284 = vmatpush1.msra.mxu0 0.0
        %285 = vmatprep.subr.mxu0 0.0
        %286 = vmatpush1.msra.mxu0 0.0
        %287 = vmatprep.subr.mxu0 0.0
        %288 = vmatpush1.msra.mxu0 0.0
        %289 = vmatprep.subr.mxu0 0.0
        %290 = vmatpush1.msra.mxu0 0.0
        %291 = vmatprep.subr.mxu0 0.0
        %292 = vmatpush1.msra.mxu0 0.0
        %293 = vmatprep.subr.mxu0 0.0
        %294 = vmatpush1.msra.mxu0 0.0
        %295 = vmatprep.subr.mxu0 0.0
        %296 = vmatpush1.msra.mxu0 0.0
        %297 = vmatprep.subr.mxu0 0.0
        %298 = vmatpush1.msra.mxu0 0.0
        %299 = vmatprep.mubr.f32.mxu0 0.0
        %300 = vmatmul.mubr.f32.gmra.mrb[0].mxu0 %v233
        %v301 = vpop.f32.mrb[0].mxu0
        %v302 = vadd.f32 %v231, %v301
        %v303 = vpop.f32.mrb[0].mxu0
        %304 = vdwg.mxu0
        %306 = vrot.lane.b32.xlu0 %v302, 96
        %v307 = vpop.permute.xlu0 %306
        %vm308 = vcmask 64512
        %v309 = vsel %vm308, %v302, 0
        %v311 = vsel %vm308, %v307, 0
        %313 = vmatprep.subr.mxu0 0.0
        %314 = vmatpush1.xpose.msra.mxu0 %v311
        %315 = vmatprep.subr.mxu0 0.0
        %316 = vmatpush1.xpose.msra.mxu0 0.0
        %317 = vmatprep.subr.mxu0 0.0
        %318 = vmatpush1.xpose.msra.mxu0 0.0
        %319 = vmatprep.subr.mxu0 0.0
        %320 = vmatpush1.xpose.msra.mxu0 0.0
        %321 = vmatprep.subr.mxu0 0.0
        %322 = vmatpush1.xpose.msra.mxu0 0.0
        %323 = vmatprep.subr.mxu0 0.0
        %324 = vmatpush1.xpose.msra.mxu0 0.0
        %325 = vmatprep.subr.mxu0 0.0
        %326 = vmatpush1.xpose.msra.mxu0 0.0
        %327 = vmatprep.subr.mxu0 0.0
        %328 = vmatpush1.xpose.msra.mxu0 0.0
        %329 = vmatprep.subr.mxu0 0.0
        %330 = vmatpush1.xpose.msra.mxu0 0.0
        %331 = vmatprep.subr.mxu0 0.0
        %332 = vmatpush1.xpose.msra.mxu0 0.0
        %333 = vmatprep.subr.mxu0 0.0
        %334 = vmatpush1.xpose.msra.mxu0 0.0
        %335 = vmatprep.subr.mxu0 0.0
        %336 = vmatpush1.xpose.msra.mxu0 0.0
        %337 = vmatprep.subr.mxu0 0.0
        %338 = vmatpush1.xpose.msra.mxu0 0.0
        %339 = vmatprep.subr.mxu0 0.0
        %340 = vmatpush1.xpose.msra.mxu0 0.0
        %341 = vmatprep.subr.mxu0 0.0
        %342 = vmatpush1.xpose.msra.mxu0 0.0
        %343 = vmatprep.subr.mxu0 0.0
        %344 = vmatpush1.xpose.msra.mxu0 0.0
        %345 = vmatprep.subr.mxu0 0.0
        %346 = vmatpush1.xpose.msra.mxu0 0.0
        %347 = vmatprep.subr.mxu0 0.0
        %348 = vmatpush1.xpose.msra.mxu0 0.0
        %349 = vmatprep.subr.mxu0 0.0
        %350 = vmatpush1.xpose.msra.mxu0 0.0
        %351 = vmatprep.subr.mxu0 0.0
        %352 = vmatpush1.xpose.msra.mxu0 0.0
        %353 = vmatprep.subr.mxu0 0.0
        %354 = vmatpush1.xpose.msra.mxu0 0.0
        %355 = vmatprep.subr.mxu0 0.0
        %356 = vmatpush1.xpose.msra.mxu0 0.0
        %357 = vmatprep.subr.mxu0 0.0
        %358 = vmatpush1.xpose.msra.mxu0 0.0
        %359 = vmatprep.subr.mxu0 0.0
        %360 = vmatpush1.xpose.msra.mxu0 0.0
        %361 = vmatprep.subr.mxu0 0.0
        %362 = vmatpush1.xpose.msra.mxu0 0.0
        %363 = vmatprep.subr.mxu0 0.0
        %364 = vmatpush1.xpose.msra.mxu0 0.0
        %365 = vmatprep.subr.mxu0 0.0
        %366 = vmatpush1.xpose.msra.mxu0 0.0
        %367 = vmatprep.subr.mxu0 0.0
        %368 = vmatpush1.xpose.msra.mxu0 0.0
        %369 = vmatprep.subr.mxu0 0.0
        %370 = vmatpush1.xpose.msra.mxu0 0.0
        %371 = vmatprep.subr.mxu0 0.0
        %372 = vmatpush1.xpose.msra.mxu0 0.0
        %373 = vmatprep.subr.mxu0 0.0
        %374 = vmatpush1.xpose.msra.mxu0 0.0
        %375 = vmatprep.subr.mxu0 0.0
        %376 = vmatpush1.xpose.msra.mxu0 0.0
        %377 = vmatprep.mubr.f32.mxu0 0.0
        %378 = vmatmul.mubr.f32.gmra.mrb[0].mxu0 %v309
        %v379 = vpop.f32.mrb[0].mxu0
        %v380 = vadd.f32 0.0, %v379
        %v381 = vpop.f32.mrb[0].mxu0
        %382 = vdwg.mxu0
        %v383 = vmul.f32 %v380, 0.35355338
        %v384 = vsel %vm308, %v383, -inf
        %385 = vmax.xlane.f32.xlu0 %v384
        %v386 = vpop.xlane.xlu0 %385
        %v387 = vsub.f32 %v383, %v386
        %v388 = vmul.f32 %v387, 1.442695
        %v389 = vpow.pop %v388
        %v390 = vsel %vm308, %v389, 0.0
        %391 = vadd.xlane.f32.xlu0 %v390
        %v392 = vpop.xlane.xlu0 %391
        %393 = vrot.lane.b32.xlu0 %v302, 64
        %v394 = vpop.permute.xlu0 %393
        %v397 = vsel %vm308, %v389, 0
        %399 = vmatprep.subr.mxu0 0.0
        %400 = vmatpush1.msra.mxu0 %v394
        %401 = vmatprep.subr.mxu0 0.0
        %402 = vmatpush1.msra.mxu0 0.0
        %403 = vmatprep.subr.mxu0 0.0
        %404 = vmatpush1.msra.mxu0 0.0
        %405 = vmatprep.subr.mxu0 0.0
        %406 = vmatpush1.msra.mxu0 0.0
        %407 = vmatprep.subr.mxu0 0.0
        %408 = vmatpush1.msra.mxu0 0.0
        %409 = vmatprep.subr.mxu0 0.0
        %410 = vmatpush1.msra.mxu0 0.0
        %411 = vmatprep.subr.mxu0 0.0
        %412 = vmatpush1.msra.mxu0 0.0
        %413 = vmatprep.subr.mxu0 0.0
        %414 = vmatpush1.msra.mxu0 0.0
        %415 = vmatprep.subr.mxu0 0.0
        %416 = vmatpush1.msra.mxu0 0.0
        %417 = vmatprep.subr.mxu0 0.0
        %418 = vmatpush1.msra.mxu0 0.0
        %419 = vmatprep.subr.mxu0 0.0
        %420 = vmatpush1.msra.mxu0 0.0
        %421 = vmatprep.subr.mxu0 0.0
        %422 = vmatpush1.msra.mxu0 0.0
        %423 = vmatprep.subr.mxu0 0.0
        %424 = vmatpush1.msra.mxu0 0.0
        %425 = vmatprep.subr.mxu0 0.0
        %426 = vmatpush1.msra.mxu0 0.0
        %427 = vmatprep.subr.mxu0 0.0
        %428 = vmatpush1.msra.mxu0 0.0
        %429 = vmatprep.subr.mxu0 0.0
        %430 = vmatpush1.msra.mxu0 0.0
        %431 = vmatprep.subr.mxu0 0.0
        %432 = vmatpush1.msra.mxu0 0.0
        %433 = vmatprep.subr.mxu0 0.0
        %434 = vmatpush1.msra.mxu0 0.0
        %435 = vmatprep.subr.mxu0 0.0
        %436 = vmatpush1.msra.mxu0 0.0
        %437 = vmatprep.subr.mxu0 0.0
        %438 = vmatpush1.msra.mxu0 0.0
        %439 = vmatprep.subr.mxu0 0.0
        %440 = vmatpush1.msra.mxu0 0.0
        %441 = vmatprep.subr.mxu0 0.0
        %442 = vmatpush1.msra.mxu0 0.0
        %443 = vmatprep.subr.mxu0 0.0
        %444 = vmatpush1.msra.mxu0 0.0
        %445 = vmatprep.subr.mxu0 0.0
        %446 = vmatpush1.msra.mxu0 0.0
        %447 = vmatprep.subr.mxu0 0.0
        %448 = vmatpush1.msra.mxu0 0.0
        %449 = vmatprep.subr.mxu0 0.0
        %450 = vmatpush1.msra.mxu0 0.0
        %451 = vmatprep.subr.mxu0 0.0
        %452 = vmatpush1.msra.mxu0 0.0
        %453 = vmatprep.subr.mxu0 0.0
        %454 = vmatpush1.msra.mxu0 0.0
        %455 = vmatprep.subr.mxu0 0.0
        %456 = vmatpush1.msra.mxu0 0.0
        %457 = vmatprep.subr.mxu0 0.0
        %458 = vmatpush1.msra.mxu0 0.0
        %459 = vmatprep.subr.mxu0 0.0
        %460 = vmatpush1.msra.mxu0 0.0
        %461 = vmatprep.subr.mxu0 0.0
        %462 = vmatpush1.msra.mxu0 0.0
        %463 = vmatprep.mubr.f32.mxu0 0.0
        %464 = vmatmul.mubr.f32.gmra.mrb[0].mxu0 %v397
        %v465 = vpop.f32.mrb[0].mxu0
        %v466 = vadd.f32 0.0, %v465
        %v467 = vpop.f32.mrb[0].mxu0
        %468 = vdwg.mxu0
        %v469 = vrcp.pop %v392
        %v470 = vmul.f32 %v466, %v469
        %471 = vrot.lane.b32.xlu0 %v302, 120
        %v472 = vpop.permute.xlu0 %471
        %473 = vrot.lane.b32.xlu0 %v302, 88
        %v474 = vpop.permute.xlu0 %473
        %v475 = vsel %vm308, %v472, 0
        %v477 = vsel %vm308, %v474, 0
        %479 = vmatprep.subr.mxu0 0.0
        %480 = vmatpush1.xpose.msra.mxu0 %v477
        %481 = vmatprep.subr.mxu0 0.0
        %482 = vmatpush1.xpose.msra.mxu0 0.0
        %483 = vmatprep.subr.mxu0 0.0
        %484 = vmatpush1.xpose.msra.mxu0 0.0
        %485 = vmatprep.subr.mxu0 0.0
        %486 = vmatpush1.xpose.msra.mxu0 0.0
        %487 = vmatprep.subr.mxu0 0.0
        %488 = vmatpush1.xpose.msra.mxu0 0.0
        %489 = vmatprep.subr.mxu0 0.0
        %490 = vmatpush1.xpose.msra.mxu0 0.0
        %491 = vmatprep.subr.mxu0 0.0
        %492 = vmatpush1.xpose.msra.mxu0 0.0
        %493 = vmatprep.subr.mxu0 0.0
        %494 = vmatpush1.xpose.msra.mxu0 0.0
        %495 = vmatprep.subr.mxu0 0.0
        %496 = vmatpush1.xpose.msra.mxu0 0.0
        %497 = vmatprep.subr.mxu0 0.0
        %498 = vmatpush1.xpose.msra.mxu0 0.0
        %499 = vmatprep.subr.mxu0 0.0
        %500 = vmatpush1.xpose.msra.mxu0 0.0
        %501 = vmatprep.subr.mxu0 0.0
        %502 = vmatpush1.xpose.msra.mxu0 0.0
        %503 = vmatprep.subr.mxu0 0.0
        %504 = vmatpush1.xpose.msra.mxu0 0.0
        %505 = vmatprep.subr.mxu0 0.0
        %506 = vmatpush1.xpose.msra.mxu0 0.0
        %507 = vmatprep.subr.mxu0 0.0
        %508 = vmatpush1.xpose.msra.mxu0 0.0
        %509 = vmatprep.subr.mxu0 0.0
        %510 = vmatpush1.xpose.msra.mxu0 0.0
        %511 = vmatprep.subr.mxu0 0.0
        %512 = vmatpush1.xpose.msra.mxu0 0.0
        %513 = vmatprep.subr.mxu0 0.0
        %514 = vmatpush1.xpose.msra.mxu0 0.0
        %515 = vmatprep.subr.mxu0 0.0
        %516 = vmatpush1.xpose.msra.mxu0 0.0
        %517 = vmatprep.subr.mxu0 0.0
        %518 = vmatpush1.xpose.msra.mxu0 0.0
        %519 = vmatprep.subr.mxu0 0.0
        %520 = vmatpush1.xpose.msra.mxu0 0.0
        %521 = vmatprep.subr.mxu0 0.0
        %522 = vmatpush1.xpose.msra.mxu0 0.0
        %523 = vmatprep.subr.mxu0 0.0
        %524 = vmatpush1.xpose.msra.mxu0 0.0
        %525 = vmatprep.subr.mxu0 0.0
        %526 = vmatpush1.xpose.msra.mxu0 0.0
        %527 = vmatprep.subr.mxu0 0.0
        %528 = vmatpush1.xpose.msra.mxu0 0.0
        %529 = vmatprep.subr.mxu0 0.0
        %530 = vmatpush1.xpose.msra.mxu0 0.0
        %531 = vmatprep.subr.mxu0 0.0
        %532 = vmatpush1.xpose.msra.mxu0 0.0
        %533 = vmatprep.subr.mxu0 0.0
        %534 = vmatpush1.xpose.msra.mxu0 0.0
        %535 = vmatprep.subr.mxu0 0.0
        %536 = vmatpush1.xpose.msra.mxu0 0.0
        %537 = vmatprep.subr.mxu0 0.0
        %538 = vmatpush1.xpose.msra.mxu0 0.0
        %539 = vmatprep.subr.mxu0 0.0
        %540 = vmatpush1.xpose.msra.mxu0 0.0
        %541 = vmatprep.subr.mxu0 0.0
        %542 = vmatpush1.xpose.msra.mxu0 0.0
        %543 = vmatprep.mubr.f32.mxu0 0.0
        %544 = vmatmul.mubr.f32.gmra.mrb[0].mxu0 %v475
        %v545 = vpop.f32.mrb[0].mxu0
        %v546 = vadd.f32 0.0, %v545
        %v547 = vpop.f32.mrb[0].mxu0
        %548 = vdwg.mxu0
        %v549 = vmul.f32 %v546, 0.35355338
        %v550 = vsel %vm308, %v549, -inf
        %551 = vmax.xlane.f32.xlu0 %v550
        %v552 = vpop.xlane.xlu0 %551
        %v553 = vsub.f32 %v549, %v552
        %v554 = vmul.f32 %v553, 1.442695
        %v555 = vpow.pop %v554
        %v556 = vsel %vm308, %v555, 0.0
        %557 = vadd.xlane.f32.xlu0 %v556
        %v558 = vpop.xlane.xlu0 %557
        %559 = vrot.lane.b32.xlu0 %v302, 56
        %v560 = vpop.permute.xlu0 %559
        %v563 = vsel %vm308, %v555, 0
        %565 = vmatprep.subr.mxu0 0.0
        %566 = vmatpush1.msra.mxu0 %v560
        %567 = vmatprep.subr.mxu0 0.0
        %568 = vmatpush1.msra.mxu0 0.0
        %569 = vmatprep.subr.mxu0 0.0
        %570 = vmatpush1.msra.mxu0 0.0
        %571 = vmatprep.subr.mxu0 0.0
        %572 = vmatpush1.msra.mxu0 0.0
        %573 = vmatprep.subr.mxu0 0.0
        %574 = vmatpush1.msra.mxu0 0.0
        %575 = vmatprep.subr.mxu0 0.0
        %576 = vmatpush1.msra.mxu0 0.0
        %577 = vmatprep.subr.mxu0 0.0
        %578 = vmatpush1.msra.mxu0 0.0
        %579 = vmatprep.subr.mxu0 0.0
        %580 = vmatpush1.msra.mxu0 0.0
        %581 = vmatprep.subr.mxu0 0.0
        %582 = vmatpush1.msra.mxu0 0.0
        %583 = vmatprep.subr.mxu0 0.0
        %584 = vmatpush1.msra.mxu0 0.0
        %585 = vmatprep.subr.mxu0 0.0
        %586 = vmatpush1.msra.mxu0 0.0
        %587 = vmatprep.subr.mxu0 0.0
        %588 = vmatpush1.msra.mxu0 0.0
        %589 = vmatprep.subr.mxu0 0.0
        %590 = vmatpush1.msra.mxu0 0.0
        %591 = vmatprep.subr.mxu0 0.0
        %592 = vmatpush1.msra.mxu0 0.0
        %593 = vmatprep.subr.mxu0 0.0
        %594 = vmatpush1.msra.mxu0 0.0
        %595 = vmatprep.subr.mxu0 0.0
        %596 = vmatpush1.msra.mxu0 0.0
        %597 = vmatprep.subr.mxu0 0.0
        %598 = vmatpush1.msra.mxu0 0.0
        %599 = vmatprep.subr.mxu0 0.0
        %600 = vmatpush1.msra.mxu0 0.0
        %601 = vmatprep.subr.mxu0 0.0
        %602 = vmatpush1.msra.mxu0 0.0
        %603 = vmatprep.subr.mxu0 0.0
        %604 = vmatpush1.msra.mxu0 0.0
        %605 = vmatprep.subr.mxu0 0.0
        %606 = vmatpush1.msra.mxu0 0.0
        %607 = vmatprep.subr.mxu0 0.0
        %608 = vmatpush1.msra.mxu0 0.0
        %609 = vmatprep.subr.mxu0 0.0
        %610 = vmatpush1.msra.mxu0 0.0
        %611 = vmatprep.subr.mxu0 0.0
        %612 = vmatpush1.msra.mxu0 0.0
        %613 = vmatprep.subr.mxu0 0.0
        %614 = vmatpush1.msra.mxu0 0.0
        %615 = vmatprep.subr.mxu0 0.0
        %616 = vmatpush1.msra.mxu0 0.0
        %617 = vmatprep.subr.mxu0 0.0
        %618 = vmatpush1.msra.mxu0 0.0
        %619 = vmatprep.subr.mxu0 0.0
        %620 = vmatpush1.msra.mxu0 0.0
        %621 = vmatprep.subr.mxu0 0.0
        %622 = vmatpush1.msra.mxu0 0.0
        %623 = vmatprep.subr.mxu0 0.0
        %624 = vmatpush1.msra.mxu0 0.0
        %625 = vmatprep.subr.mxu0 0.0
        %626 = vmatpush1.msra.mxu0 0.0
        %627 = vmatprep.subr.mxu0 0.0
        %628 = vmatpush1.msra.mxu0 0.0
        %629 = vmatprep.mubr.f32.mxu0 0.0
        %630 = vmatmul.mubr.f32.gmra.mrb[0].mxu0 %v563
        %v631 = vpop.f32.mrb[0].mxu0
        %v632 = vadd.f32 0.0, %v631
        %v633 = vpop.f32.mrb[0].mxu0
        %634 = vdwg.mxu0
        %v635 = vrcp.pop %v558
        %v636 = vmul.f32 %v632, %v635
        %638 = vrot.lane.b32.xlu0 %v196, 32
        %v639 = vpop.permute.xlu0 %638
        %v642 = vsel %vm308, %v636, 0
        %644 = vmatprep.subr.mxu0 0.0
        %645 = vmatpush1.msra.mxu0 %v639
        %646 = vmatprep.subr.mxu0 0.0
        %647 = vmatpush1.msra.mxu0 0.0
        %648 = vmatprep.subr.mxu0 0.0
        %649 = vmatpush1.msra.mxu0 0.0
        %650 = vmatprep.subr.mxu0 0.0
        %651 = vmatpush1.msra.mxu0 0.0
        %652 = vmatprep.subr.mxu0 0.0
        %653 = vmatpush1.msra.mxu0 0.0
        %654 = vmatprep.subr.mxu0 0.0
        %655 = vmatpush1.msra.mxu0 0.0
        %656 = vmatprep.subr.mxu0 0.0
        %657 = vmatpush1.msra.mxu0 0.0
        %658 = vmatprep.subr.mxu0 0.0
        %659 = vmatpush1.msra.mxu0 0.0
        %660 = vmatprep.subr.mxu0 0.0
        %661 = vmatpush1.msra.mxu0 0.0
        %662 = vmatprep.subr.mxu0 0.0
        %663 = vmatpush1.msra.mxu0 0.0
        %664 = vmatprep.subr.mxu0 0.0
        %665 = vmatpush1.msra.mxu0 0.0
        %666 = vmatprep.subr.mxu0 0.0
        %667 = vmatpush1.msra.mxu0 0.0
        %668 = vmatprep.subr.mxu0 0.0
        %669 = vmatpush1.msra.mxu0 0.0
        %670 = vmatprep.subr.mxu0 0.0
        %671 = vmatpush1.msra.mxu0 0.0
        %672 = vmatprep.subr.mxu0 0.0
        %673 = vmatpush1.msra.mxu0 0.0
        %674 = vmatprep.subr.mxu0 0.0
        %675 = vmatpush1.msra.mxu0 0.0
        %676 = vmatprep.subr.mxu0 0.0
        %677 = vmatpush1.msra.mxu0 0.0
        %678 = vmatprep.subr.mxu0 0.0
        %679 = vmatpush1.msra.mxu0 0.0
        %680 = vmatprep.subr.mxu0 0.0
        %681 = vmatpush1.msra.mxu0 0.0
        %682 = vmatprep.subr.mxu0 0.0
        %683 = vmatpush1.msra.mxu0 0.0
        %684 = vmatprep.subr.mxu0 0.0
        %685 = vmatpush1.msra.mxu0 0.0
        %686 = vmatprep.subr.mxu0 0.0
        %687 = vmatpush1.msra.mxu0 0.0
        %688 = vmatprep.subr.mxu0 0.0
        %689 = vmatpush1.msra.mxu0 0.0
        %690 = vmatprep.subr.mxu0 0.0
        %691 = vmatpush1.msra.mxu0 0.0
        %692 = vmatprep.subr.mxu0 0.0
        %693 = vmatpush1.msra.mxu0 0.0
        %694 = vmatprep.subr.mxu0 0.0
        %695 = vmatpush1.msra.mxu0 0.0
        %696 = vmatprep.subr.mxu0 0.0
        %697 = vmatpush1.msra.mxu0 0.0
        %698 = vmatprep.subr.mxu0 0.0
        %699 = vmatpush1.msra.mxu0 0.0
        %700 = vmatprep.subr.mxu0 0.0
        %701 = vmatpush1.msra.mxu0 0.0
        %702 = vmatprep.subr.mxu0 0.0
        %703 = vmatpush1.msra.mxu0 0.0
        %704 = vmatprep.subr.mxu0 0.0
        %705 = vmatpush1.msra.mxu0 0.0
        %706 = vmatprep.subr.mxu0 0.0
        %707 = vmatpush1.msra.mxu0 0.0
        %708 = vmatprep.mubr.f32.mxu0 0.0
        %709 = vmatmul.mubr.f32.gmra.mrb[0].mxu0 %v642
        %v710 = vpop.f32.mrb[0].mxu0
        %v711 = vadd.f32 0.0, %v710
        %v712 = vpop.f32.mrb[0].mxu0
        %713 = vdwg.mxu0
        %715 = vrot.lane.b32.xlu0 %v194, 32
        %v716 = vpop.permute.xlu0 %715
        %v719 = vsel %vm308, %v470, 0
        %721 = vmatprep.subr.mxu0 0.0
        %722 = vmatpush1.msra.mxu0 %v716
        %723 = vmatprep.subr.mxu0 0.0
        %724 = vmatpush1.msra.mxu0 0.0
        %725 = vmatprep.subr.mxu0 0.0
        %726 = vmatpush1.msra.mxu0 0.0
        %727 = vmatprep.subr.mxu0 0.0
        %728 = vmatpush1.msra.mxu0 0.0
        %729 = vmatprep.subr.mxu0 0.0
        %730 = vmatpush1.msra.mxu0 0.0
        %731 = vmatprep.subr.mxu0 0.0
        %732 = vmatpush1.msra.mxu0 0.0
        %733 = vmatprep.subr.mxu0 0.0
        %734 = vmatpush1.msra.mxu0 0.0
        %735 = vmatprep.subr.mxu0 0.0
        %736 = vmatpush1.msra.mxu0 0.0
        %737 = vmatprep.subr.mxu0 0.0
        %738 = vmatpush1.msra.mxu0 0.0
        %739 = vmatprep.subr.mxu0 0.0
        %740 = vmatpush1.msra.mxu0 0.0
        %741 = vmatprep.subr.mxu0 0.0
        %742 = vmatpush1.msra.mxu0 0.0
        %743 = vmatprep.subr.mxu0 0.0
        %744 = vmatpush1.msra.mxu0 0.0
        %745 = vmatprep.subr.mxu0 0.0
        %746 = vmatpush1.msra.mxu0 0.0
        %747 = vmatprep.subr.mxu0 0.0
        %748 = vmatpush1.msra.mxu0 0.0
        %749 = vmatprep.subr.mxu0 0.0
        %750 = vmatpush1.msra.mxu0 0.0
        %751 = vmatprep.subr.mxu0 0.0
        %752 = vmatpush1.msra.mxu0 0.0
        %753 = vmatprep.subr.mxu0 0.0
        %754 = vmatpush1.msra.mxu0 0.0
        %755 = vmatprep.subr.mxu0 0.0
        %756 = vmatpush1.msra.mxu0 0.0
        %757 = vmatprep.subr.mxu0 0.0
        %758 = vmatpush1.msra.mxu0 0.0
        %759 = vmatprep.subr.mxu0 0.0
        %760 = vmatpush1.msra.mxu0 0.0
        %761 = vmatprep.subr.mxu0 0.0
        %762 = vmatpush1.msra.mxu0 0.0
        %763 = vmatprep.subr.mxu0 0.0
        %764 = vmatpush1.msra.mxu0 0.0
        %765 = vmatprep.subr.mxu0 0.0
        %766 = vmatpush1.msra.mxu0 0.0
        %767 = vmatprep.subr.mxu0 0.0
        %768 = vmatpush1.msra.mxu0 0.0
        %769 = vmatprep.subr.mxu0 0.0
        %770 = vmatpush1.msra.mxu0 0.0
        %771 = vmatprep.subr.mxu0 0.0
        %772 = vmatpush1.msra.mxu0 0.0
        %773 = vmatprep.subr.mxu0 0.0
        %774 = vmatpush1.msra.mxu0 0.0
        %775 = vmatprep.subr.mxu0 0.0
        %776 = vmatpush1.msra.mxu0 0.0
        %777 = vmatprep.subr.mxu0 0.0
        %778 = vmatpush1.msra.mxu0 0.0
        %779 = vmatprep.subr.mxu0 0.0
        %780 = vmatpush1.msra.mxu0 0.0
        %781 = vmatprep.subr.mxu0 0.0
        %782 = vmatpush1.msra.mxu0 0.0
        %783 = vmatprep.subr.mxu0 0.0
        %784 = vmatpush1.msra.mxu0 0.0
        %785 = vmatprep.mubr.f32.mxu0 0.0
        %786 = vmatmul.mubr.f32.gmra.mrb[0].mxu0 %v719
        %v787 = vpop.f32.mrb[0].mxu0
        %v788 = vadd.f32 %v711, %v787
        %v789 = vpop.f32.mrb[0].mxu0
        %790 = vdwg.mxu0
        %791 = vrot.lane.b32.xlu0 %v302, 112
        %v792 = vpop.permute.xlu0 %791
        %793 = vrot.lane.b32.xlu0 %v302, 80
        %v794 = vpop.permute.xlu0 %793
        %v795 = vsel %vm308, %v792, 0
        %v797 = vsel %vm308, %v794, 0
        %799 = vmatprep.subr.mxu0 0.0
        %800 = vmatpush1.xpose.msra.mxu0 %v797
        %801 = vmatprep.subr.mxu0 0.0
        %802 = vmatpush1.xpose.msra.mxu0 0.0
        %803 = vmatprep.subr.mxu0 0.0
        %804 = vmatpush1.xpose.msra.mxu0 0.0
        %805 = vmatprep.subr.mxu0 0.0
        %806 = vmatpush1.xpose.msra.mxu0 0.0
        %807 = vmatprep.subr.mxu0 0.0
        %808 = vmatpush1.xpose.msra.mxu0 0.0
        %809 = vmatprep.subr.mxu0 0.0
        %810 = vmatpush1.xpose.msra.mxu0 0.0
        %811 = vmatprep.subr.mxu0 0.0
        %812 = vmatpush1.xpose.msra.mxu0 0.0
        %813 = vmatprep.subr.mxu0 0.0
        %814 = vmatpush1.xpose.msra.mxu0 0.0
        %815 = vmatprep.subr.mxu0 0.0
        %816 = vmatpush1.xpose.msra.mxu0 0.0
        %817 = vmatprep.subr.mxu0 0.0
        %818 = vmatpush1.xpose.msra.mxu0 0.0
        %819 = vmatprep.subr.mxu0 0.0
        %820 = vmatpush1.xpose.msra.mxu0 0.0
        %821 = vmatprep.subr.mxu0 0.0
        %822 = vmatpush1.xpose.msra.mxu0 0.0
        %823 = vmatprep.subr.mxu0 0.0
        %824 = vmatpush1.xpose.msra.mxu0 0.0
        %825 = vmatprep.subr.mxu0 0.0
        %826 = vmatpush1.xpose.msra.mxu0 0.0
        %827 = vmatprep.subr.mxu0 0.0
        %828 = vmatpush1.xpose.msra.mxu0 0.0
        %829 = vmatprep.subr.mxu0 0.0
        %830 = vmatpush1.xpose.msra.mxu0 0.0
        %831 = vmatprep.subr.mxu0 0.0
        %832 = vmatpush1.xpose.msra.mxu0 0.0
        %833 = vmatprep.subr.mxu0 0.0
        %834 = vmatpush1.xpose.msra.mxu0 0.0
        %835 = vmatprep.subr.mxu0 0.0
        %836 = vmatpush1.xpose.msra.mxu0 0.0
        %837 = vmatprep.subr.mxu0 0.0
        %838 = vmatpush1.xpose.msra.mxu0 0.0
        %839 = vmatprep.subr.mxu0 0.0
        %840 = vmatpush1.xpose.msra.mxu0 0.0
        %841 = vmatprep.subr.mxu0 0.0
        %842 = vmatpush1.xpose.msra.mxu0 0.0
        %843 = vmatprep.subr.mxu0 0.0
        %844 = vmatpush1.xpose.msra.mxu0 0.0
        %845 = vmatprep.subr.mxu0 0.0
        %846 = vmatpush1.xpose.msra.mxu0 0.0
        %847 = vmatprep.subr.mxu0 0.0
        %848 = vmatpush1.xpose.msra.mxu0 0.0
        %849 = vmatprep.subr.mxu0 0.0
        %850 = vmatpush1.xpose.msra.mxu0 0.0
        %851 = vmatprep.subr.mxu0 0.0
        %852 = vmatpush1.xpose.msra.mxu0 0.0
        %853 = vmatprep.subr.mxu0 0.0
        %854 = vmatpush1.xpose.msra.mxu0 0.0
        %855 = vmatprep.subr.mxu0 0.0
        %856 = vmatpush1.xpose.msra.mxu0 0.0
        %857 = vmatprep.subr.mxu0 0.0
        %858 = vmatpush1.xpose.msra.mxu0 0.0
        %859 = vmatprep.subr.mxu0 0.0
        %860 = vmatpush1.xpose.msra.mxu0 0.0
        %861 = vmatprep.subr.mxu0 0.0
        %862 = vmatpush1.xpose.msra.mxu0 0.0
        %863 = vmatprep.mubr.f32.mxu0 0.0
        %864 = vmatmul.mubr.f32.gmra.mrb[0].mxu0 %v795
        %v865 = vpop.f32.mrb[0].mxu0
        %v866 = vadd.f32 0.0, %v865
        %v867 = vpop.f32.mrb[0].mxu0
        %868 = vdwg.mxu0
        %v869 = vmul.f32 %v866, 0.35355338
        %v870 = vsel %vm308, %v869, -inf
        %871 = vmax.xlane.f32.xlu0 %v870
        %v872 = vpop.xlane.xlu0 %871
        %v873 = vsub.f32 %v869, %v872
        %v874 = vmul.f32 %v873, 1.442695
        %v875 = vpow.pop %v874
        %v876 = vsel %vm308, %v875, 0.0
        %877 = vadd.xlane.f32.xlu0 %v876
        %v878 = vpop.xlane.xlu0 %877
        %879 = vrot.lane.b32.xlu0 %v302, 48
        %v880 = vpop.permute.xlu0 %879
        %v883 = vsel %vm308, %v875, 0
        %885 = vmatprep.subr.mxu0 0.0
        %886 = vmatpush1.msra.mxu0 %v880
        %887 = vmatprep.subr.mxu0 0.0
        %888 = vmatpush1.msra.mxu0 0.0
        %889 = vmatprep.subr.mxu0 0.0
        %890 = vmatpush1.msra.mxu0 0.0
        %891 = vmatprep.subr.mxu0 0.0
        %892 = vmatpush1.msra.mxu0 0.0
        %893 = vmatprep.subr.mxu0 0.0
        %894 = vmatpush1.msra.mxu0 0.0
        %895 = vmatprep.subr.mxu0 0.0
        %896 = vmatpush1.msra.mxu0 0.0
        %897 = vmatprep.subr.mxu0 0.0
        %898 = vmatpush1.msra.mxu0 0.0
        %899 = vmatprep.subr.mxu0 0.0
        %900 = vmatpush1.msra.mxu0 0.0
        %901 = vmatprep.subr.mxu0 0.0
        %902 = vmatpush1.msra.mxu0 0.0
        %903 = vmatprep.subr.mxu0 0.0
        %904 = vmatpush1.msra.mxu0 0.0
        %905 = vmatprep.subr.mxu0 0.0
        %906 = vmatpush1.msra.mxu0 0.0
        %907 = vmatprep.subr.mxu0 0.0
        %908 = vmatpush1.msra.mxu0 0.0
        %909 = vmatprep.subr.mxu0 0.0
        %910 = vmatpush1.msra.mxu0 0.0
        %911 = vmatprep.subr.mxu0 0.0
        %912 = vmatpush1.msra.mxu0 0.0
        %913 = vmatprep.subr.mxu0 0.0
        %914 = vmatpush1.msra.mxu0 0.0
        %915 = vmatprep.subr.mxu0 0.0
        %916 = vmatpush1.msra.mxu0 0.0
        %917 = vmatprep.subr.mxu0 0.0
        %918 = vmatpush1.msra.mxu0 0.0
        %919 = vmatprep.subr.mxu0 0.0
        %920 = vmatpush1.msra.mxu0 0.0
        %921 = vmatprep.subr.mxu0 0.0
        %922 = vmatpush1.msra.mxu0 0.0
        %923 = vmatprep.subr.mxu0 0.0
        %924 = vmatpush1.msra.mxu0 0.0
        %925 = vmatprep.subr.mxu0 0.0
        %926 = vmatpush1.msra.mxu0 0.0
        %927 = vmatprep.subr.mxu0 0.0
        %928 = vmatpush1.msra.mxu0 0.0
        %929 = vmatprep.subr.mxu0 0.0
        %930 = vmatpush1.msra.mxu0 0.0
        %931 = vmatprep.subr.mxu0 0.0
        %932 = vmatpush1.msra.mxu0 0.0
        %933 = vmatprep.subr.mxu0 0.0
        %934 = vmatpush1.msra.mxu0 0.0
        %935 = vmatprep.subr.mxu0 0.0
        %936 = vmatpush1.msra.mxu0 0.0
        %937 = vmatprep.subr.mxu0 0.0
        %938 = vmatpush1.msra.mxu0 0.0
        %939 = vmatprep.subr.mxu0 0.0
        %940 = vmatpush1.msra.mxu0 0.0
        %941 = vmatprep.subr.mxu0 0.0
        %942 = vmatpush1.msra.mxu0 0.0
        %943 = vmatprep.subr.mxu0 0.0
        %944 = vmatpush1.msra.mxu0 0.0
        %945 = vmatprep.subr.mxu0 0.0
        %946 = vmatpush1.msra.mxu0 0.0
        %947 = vmatprep.subr.mxu0 0.0
        %948 = vmatpush1.msra.mxu0 0.0
        %949 = vmatprep.mubr.f32.mxu0 0.0
        %950 = vmatmul.mubr.f32.gmra.mrb[0].mxu0 %v883
        %v951 = vpop.f32.mrb[0].mxu0
        %v952 = vadd.f32 0.0, %v951
        %v953 = vpop.f32.mrb[0].mxu0
        %954 = vdwg.mxu0
        %v955 = vrcp.pop %v878
        %v956 = vmul.f32 %v952, %v955
        %958 = vrot.lane.b32.xlu0 %v198, 32
        %v959 = vpop.permute.xlu0 %958
        %v962 = vsel %vm308, %v956, 0
        %964 = vmatprep.subr.mxu0 0.0
        %965 = vmatpush1.msra.mxu0 %v959
        %966 = vmatprep.subr.mxu0 0.0
        %967 = vmatpush1.msra.mxu0 0.0
        %968 = vmatprep.subr.mxu0 0.0
        %969 = vmatpush1.msra.mxu0 0.0
        %970 = vmatprep.subr.mxu0 0.0
        %971 = vmatpush1.msra.mxu0 0.0
        %972 = vmatprep.subr.mxu0 0.0
        %973 = vmatpush1.msra.mxu0 0.0
        %974 = vmatprep.subr.mxu0 0.0
        %975 = vmatpush1.msra.mxu0 0.0
        %976 = vmatprep.subr.mxu0 0.0
        %977 = vmatpush1.msra.mxu0 0.0
        %978 = vmatprep.subr.mxu0 0.0
        %979 = vmatpush1.msra.mxu0 0.0
        %980 = vmatprep.subr.mxu0 0.0
        %981 = vmatpush1.msra.mxu0 0.0
        %982 = vmatprep.subr.mxu0 0.0
        %983 = vmatpush1.msra.mxu0 0.0
        %984 = vmatprep.subr.mxu0 0.0
        %985 = vmatpush1.msra.mxu0 0.0
        %986 = vmatprep.subr.mxu0 0.0
        %987 = vmatpush1.msra.mxu0 0.0
        %988 = vmatprep.subr.mxu0 0.0
        %989 = vmatpush1.msra.mxu0 0.0
        %990 = vmatprep.subr.mxu0 0.0
        %991 = vmatpush1.msra.mxu0 0.0
        %992 = vmatprep.subr.mxu0 0.0
        %993 = vmatpush1.msra.mxu0 0.0
        %994 = vmatprep.subr.mxu0 0.0
        %995 = vmatpush1.msra.mxu0 0.0
        %996 = vmatprep.subr.mxu0 0.0
        %997 = vmatpush1.msra.mxu0 0.0
        %998 = vmatprep.subr.mxu0 0.0
        %999 = vmatpush1.msra.mxu0 0.0
        %1000 = vmatprep.subr.mxu0 0.0
        %1001 = vmatpush1.msra.mxu0 0.0
        %1002 = vmatprep.subr.mxu0 0.0
        %1003 = vmatpush1.msra.mxu0 0.0
        %1004 = vmatprep.subr.mxu0 0.0
        %1005 = vmatpush1.msra.mxu0 0.0
        %1006 = vmatprep.subr.mxu0 0.0
        %1007 = vmatpush1.msra.mxu0 0.0
        %1008 = vmatprep.subr.mxu0 0.0
        %1009 = vmatpush1.msra.mxu0 0.0
        %1010 = vmatprep.subr.mxu0 0.0
        %1011 = vmatpush1.msra.mxu0 0.0
        %1012 = vmatprep.subr.mxu0 0.0
        %1013 = vmatpush1.msra.mxu0 0.0
        %1014 = vmatprep.subr.mxu0 0.0
        %1015 = vmatpush1.msra.mxu0 0.0
        %1016 = vmatprep.subr.mxu0 0.0
        %1017 = vmatpush1.msra.mxu0 0.0
        %1018 = vmatprep.subr.mxu0 0.0
        %1019 = vmatpush1.msra.mxu0 0.0
        %1020 = vmatprep.subr.mxu0 0.0
        %1021 = vmatpush1.msra.mxu0 0.0
        %1022 = vmatprep.subr.mxu0 0.0
        %1023 = vmatpush1.msra.mxu0 0.0
        %1024 = vmatprep.subr.mxu0 0.0
        %1025 = vmatpush1.msra.mxu0 0.0
        %1026 = vmatprep.subr.mxu0 0.0
        %1027 = vmatpush1.msra.mxu0 0.0
        %1028 = vmatprep.mubr.f32.mxu0 0.0
        %1029 = vmatmul.mubr.f32.gmra.mrb[0].mxu0 %v962
        %v1030 = vpop.f32.mrb[0].mxu0
        %v1031 = vadd.f32 0.0, %v1030
        %v1032 = vpop.f32.mrb[0].mxu0
        %1033 = vdwg.mxu0
        %v1034 = vadd.f32 %v788, %v1031
        %1035 = vrot.lane.b32.xlu0 %v302, 104
        %v1036 = vpop.permute.xlu0 %1035
        %1037 = vrot.lane.b32.xlu0 %v302, 72
        %v1038 = vpop.permute.xlu0 %1037
        %v1039 = vsel %vm308, %v1036, 0
        %v1041 = vsel %vm308, %v1038, 0
        %1043 = vmatprep.subr.mxu0 0.0
        %1044 = vmatpush1.xpose.msra.mxu0 %v1041
        %1045 = vmatprep.subr.mxu0 0.0
        %1046 = vmatpush1.xpose.msra.mxu0 0.0
        %1047 = vmatprep.subr.mxu0 0.0
        %1048 = vmatpush1.xpose.msra.mxu0 0.0
        %1049 = vmatprep.subr.mxu0 0.0
        %1050 = vmatpush1.xpose.msra.mxu0 0.0
        %1051 = vmatprep.subr.mxu0 0.0
        %1052 = vmatpush1.xpose.msra.mxu0 0.0
        %1053 = vmatprep.subr.mxu0 0.0
        %1054 = vmatpush1.xpose.msra.mxu0 0.0
        %1055 = vmatprep.subr.mxu0 0.0
        %1056 = vmatpush1.xpose.msra.mxu0 0.0
        %1057 = vmatprep.subr.mxu0 0.0
        %1058 = vmatpush1.xpose.msra.mxu0 0.0
        %1059 = vmatprep.subr.mxu0 0.0
        %1060 = vmatpush1.xpose.msra.mxu0 0.0
        %1061 = vmatprep.subr.mxu0 0.0
        %1062 = vmatpush1.xpose.msra.mxu0 0.0
        %1063 = vmatprep.subr.mxu0 0.0
        %1064 = vmatpush1.xpose.msra.mxu0 0.0
        %1065 = vmatprep.subr.mxu0 0.0
        %1066 = vmatpush1.xpose.msra.mxu0 0.0
        %1067 = vmatprep.subr.mxu0 0.0
        %1068 = vmatpush1.xpose.msra.mxu0 0.0
        %1069 = vmatprep.subr.mxu0 0.0
        %1070 = vmatpush1.xpose.msra.mxu0 0.0
        %1071 = vmatprep.subr.mxu0 0.0
        %1072 = vmatpush1.xpose.msra.mxu0 0.0
        %1073 = vmatprep.subr.mxu0 0.0
        %1074 = vmatpush1.xpose.msra.mxu0 0.0
        %1075 = vmatprep.subr.mxu0 0.0
        %1076 = vmatpush1.xpose.msra.mxu0 0.0
        %1077 = vmatprep.subr.mxu0 0.0
        %1078 = vmatpush1.xpose.msra.mxu0 0.0
        %1079 = vmatprep.subr.mxu0 0.0
        %1080 = vmatpush1.xpose.msra.mxu0 0.0
        %1081 = vmatprep.subr.mxu0 0.0
        %1082 = vmatpush1.xpose.msra.mxu0 0.0
        %1083 = vmatprep.subr.mxu0 0.0
        %1084 = vmatpush1.xpose.msra.mxu0 0.0
        %1085 = vmatprep.subr.mxu0 0.0
        %1086 = vmatpush1.xpose.msra.mxu0 0.0
        %1087 = vmatprep.subr.mxu0 0.0
        %1088 = vmatpush1.xpose.msra.mxu0 0.0
        %1089 = vmatprep.subr.mxu0 0.0
        %1090 = vmatpush1.xpose.msra.mxu0 0.0
        %1091 = vmatprep.subr.mxu0 0.0
        %1092 = vmatpush1.xpose.msra.mxu0 0.0
        %1093 = vmatprep.subr.mxu0 0.0
        %1094 = vmatpush1.xpose.msra.mxu0 0.0
        %1095 = vmatprep.subr.mxu0 0.0
        %1096 = vmatpush1.xpose.msra.mxu0 0.0
        %1097 = vmatprep.subr.mxu0 0.0
        %1098 = vmatpush1.xpose.msra.mxu0 0.0
        %1099 = vmatprep.subr.mxu0 0.0
        %1100 = vmatpush1.xpose.msra.mxu0 0.0
        %1101 = vmatprep.subr.mxu0 0.0
        %1102 = vmatpush1.xpose.msra.mxu0 0.0
        %1103 = vmatprep.subr.mxu0 0.0
        %1104 = vmatpush1.xpose.msra.mxu0 0.0
        %1105 = vmatprep.subr.mxu0 0.0
        %1106 = vmatpush1.xpose.msra.mxu0 0.0
        %1107 = vmatprep.mubr.f32.mxu0 0.0
        %1108 = vmatmul.mubr.f32.gmra.mrb[0].mxu0 %v1039
        %v1109 = vpop.f32.mrb[0].mxu0
        %v1110 = vadd.f32 0.0, %v1109
        %v1111 = vpop.f32.mrb[0].mxu0
        %1112 = vdwg.mxu0
        %v1113 = vmul.f32 %v1110, 0.35355338
        %v1114 = vsel %vm308, %v1113, -inf
        %1115 = vmax.xlane.f32.xlu0 %v1114
        %v1116 = vpop.xlane.xlu0 %1115
        %v1117 = vsub.f32 %v1113, %v1116
        %v1118 = vmul.f32 %v1117, 1.442695
        %v1119 = vpow.pop %v1118
        %v1120 = vsel %vm308, %v1119, 0.0
        %1121 = vadd.xlane.f32.xlu0 %v1120
        %v1122 = vpop.xlane.xlu0 %1121
        %1123 = vrot.lane.b32.xlu0 %v302, 40
        %v1124 = vpop.permute.xlu0 %1123
        %v1127 = vsel %vm308, %v1119, 0
        %1129 = vmatprep.subr.mxu0 0.0
        %1130 = vmatpush1.msra.mxu0 %v1124
        %1131 = vmatprep.subr.mxu0 0.0
        %1132 = vmatpush1.msra.mxu0 0.0
        %1133 = vmatprep.subr.mxu0 0.0
        %1134 = vmatpush1.msra.mxu0 0.0
        %1135 = vmatprep.subr.mxu0 0.0
        %1136 = vmatpush1.msra.mxu0 0.0
        %1137 = vmatprep.subr.mxu0 0.0
        %1138 = vmatpush1.msra.mxu0 0.0
        %1139 = vmatprep.subr.mxu0 0.0
        %1140 = vmatpush1.msra.mxu0 0.0
        %1141 = vmatprep.subr.mxu0 0.0
        %1142 = vmatpush1.msra.mxu0 0.0
        %1143 = vmatprep.subr.mxu0 0.0
        %1144 = vmatpush1.msra.mxu0 0.0
        %1145 = vmatprep.subr.mxu0 0.0
        %1146 = vmatpush1.msra.mxu0 0.0
        %1147 = vmatprep.subr.mxu0 0.0
        %1148 = vmatpush1.msra.mxu0 0.0
        %1149 = vmatprep.subr.mxu0 0.0
        %1150 = vmatpush1.msra.mxu0 0.0
        %1151 = vmatprep.subr.mxu0 0.0
        %1152 = vmatpush1.msra.mxu0 0.0
        %1153 = vmatprep.subr.mxu0 0.0
        %1154 = vmatpush1.msra.mxu0 0.0
        %1155 = vmatprep.subr.mxu0 0.0
        %1156 = vmatpush1.msra.mxu0 0.0
        %1157 = vmatprep.subr.mxu0 0.0
        %1158 = vmatpush1.msra.mxu0 0.0
        %1159 = vmatprep.subr.mxu0 0.0
        %1160 = vmatpush1.msra.mxu0 0.0
        %1161 = vmatprep.subr.mxu0 0.0
        %1162 = vmatpush1.msra.mxu0 0.0
        %1163 = vmatprep.subr.mxu0 0.0
        %1164 = vmatpush1.msra.mxu0 0.0
        %1165 = vmatprep.subr.mxu0 0.0
        %1166 = vmatpush1.msra.mxu0 0.0
        %1167 = vmatprep.subr.mxu0 0.0
        %1168 = vmatpush1.msra.mxu0 0.0
        %1169 = vmatprep.subr.mxu0 0.0
        %1170 = vmatpush1.msra.mxu0 0.0
        %1171 = vmatprep.subr.mxu0 0.0
        %1172 = vmatpush1.msra.mxu0 0.0
        %1173 = vmatprep.subr.mxu0 0.0
        %1174 = vmatpush1.msra.mxu0 0.0
        %1175 = vmatprep.subr.mxu0 0.0
        %1176 = vmatpush1.msra.mxu0 0.0
        %1177 = vmatprep.subr.mxu0 0.0
        %1178 = vmatpush1.msra.mxu0 0.0
        %1179 = vmatprep.subr.mxu0 0.0
        %1180 = vmatpush1.msra.mxu0 0.0
        %1181 = vmatprep.subr.mxu0 0.0
        %1182 = vmatpush1.msra.mxu0 0.0
        %1183 = vmatprep.subr.mxu0 0.0
        %1184 = vmatpush1.msra.mxu0 0.0
        %1185 = vmatprep.subr.mxu0 0.0
        %1186 = vmatpush1.msra.mxu0 0.0
        %1187 = vmatprep.subr.mxu0 0.0
        %1188 = vmatpush1.msra.mxu0 0.0
        %1189 = vmatprep.subr.mxu0 0.0
        %1190 = vmatpush1.msra.mxu0 0.0
        %1191 = vmatprep.subr.mxu0 0.0
        %1192 = vmatpush1.msra.mxu0 0.0
        %1193 = vmatprep.mubr.f32.mxu0 0.0
        %1194 = vmatmul.mubr.f32.gmra.mrb[0].mxu0 %v1127
        %v1195 = vpop.f32.mrb[0].mxu0
        %v1196 = vadd.f32 0.0, %v1195
        %v1197 = vpop.f32.mrb[0].mxu0
        %1198 = vdwg.mxu0
        %v1199 = vrcp.pop %v1122
        %v1200 = vmul.f32 %v1196, %v1199
        %1202 = vrot.lane.b32.xlu0 %v200, 32
        %v1203 = vpop.permute.xlu0 %1202
        %v1206 = vsel %vm308, %v1200, 0
        %1208 = vmatprep.subr.mxu0 0.0
        %1209 = vmatpush1.msra.mxu0 %v1203
        %1210 = vmatprep.subr.mxu0 0.0
        %1211 = vmatpush1.msra.mxu0 0.0
        %1212 = vmatprep.subr.mxu0 0.0
        %1213 = vmatpush1.msra.mxu0 0.0
        %1214 = vmatprep.subr.mxu0 0.0
        %1215 = vmatpush1.msra.mxu0 0.0
        %1216 = vmatprep.subr.mxu0 0.0
        %1217 = vmatpush1.msra.mxu0 0.0
        %1218 = vmatprep.subr.mxu0 0.0
        %1219 = vmatpush1.msra.mxu0 0.0
        %1220 = vmatprep.subr.mxu0 0.0
        %1221 = vmatpush1.msra.mxu0 0.0
        %1222 = vmatprep.subr.mxu0 0.0
        %1223 = vmatpush1.msra.mxu0 0.0
        %1224 = vmatprep.subr.mxu0 0.0
        %1225 = vmatpush1.msra.mxu0 0.0
        %1226 = vmatprep.subr.mxu0 0.0
        %1227 = vmatpush1.msra.mxu0 0.0
        %1228 = vmatprep.subr.mxu0 0.0
        %1229 = vmatpush1.msra.mxu0 0.0
        %1230 = vmatprep.subr.mxu0 0.0
        %1231 = vmatpush1.msra.mxu0 0.0
        %1232 = vmatprep.subr.mxu0 0.0
        %1233 = vmatpush1.msra.mxu0 0.0
        %1234 = vmatprep.subr.mxu0 0.0
        %1235 = vmatpush1.msra.mxu0 0.0
        %1236 = vmatprep.subr.mxu0 0.0
        %1237 = vmatpush1.msra.mxu0 0.0
        %1238 = vmatprep.subr.mxu0 0.0
        %1239 = vmatpush1.msra.mxu0 0.0
        %1240 = vmatprep.subr.mxu0 0.0
        %1241 = vmatpush1.msra.mxu0 0.0
        %1242 = vmatprep.subr.mxu0 0.0
        %1243 = vmatpush1.msra.mxu0 0.0
        %1244 = vmatprep.subr.mxu0 0.0
        %1245 = vmatpush1.msra.mxu0 0.0
        %1246 = vmatprep.subr.mxu0 0.0
        %1247 = vmatpush1.msra.mxu0 0.0
        %1248 = vmatprep.subr.mxu0 0.0
        %1249 = vmatpush1.msra.mxu0 0.0
        %1250 = vmatprep.subr.mxu0 0.0
        %1251 = vmatpush1.msra.mxu0 0.0
        %1252 = vmatprep.subr.mxu0 0.0
        %1253 = vmatpush1.msra.mxu0 0.0
        %1254 = vmatprep.subr.mxu0 0.0
        %1255 = vmatpush1.msra.mxu0 0.0
        %1256 = vmatprep.subr.mxu0 0.0
        %1257 = vmatpush1.msra.mxu0 0.0
        %1258 = vmatprep.subr.mxu0 0.0
        %1259 = vmatpush1.msra.mxu0 0.0
        %1260 = vmatprep.subr.mxu0 0.0
        %1261 = vmatpush1.msra.mxu0 0.0
        %1262 = vmatprep.subr.mxu0 0.0
        %1263 = vmatpush1.msra.mxu0 0.0
        %1264 = vmatprep.subr.mxu0 0.0
        %1265 = vmatpush1.msra.mxu0 0.0
        %1266 = vmatprep.subr.mxu0 0.0
        %1267 = vmatpush1.msra.mxu0 0.0
        %1268 = vmatprep.subr.mxu0 0.0
        %1269 = vmatpush1.msra.mxu0 0.0
        %1270 = vmatprep.subr.mxu0 0.0
        %1271 = vmatpush1.msra.mxu0 0.0
        %1272 = vmatprep.mubr.f32.mxu0 0.0
        %1273 = vmatmul.mubr.f32.gmra.mrb[0].mxu0 %v1206
        %v1274 = vpop.f32.mrb[0].mxu0
        %v1275 = vadd.f32 0.0, %v1274
        %v1276 = vpop.f32.mrb[0].mxu0
        %1277 = vdwg.mxu0
        %v1278 = vadd.f32 %v1034, %v1275
        %v1279 = vlaneseq
        %v1280 = vshrl.u32 %v1279, 7
        %v1281 = vsub.s32 4, %v1280
        %v1282 = vrot.slane %v202, %v1281
        %v1283 = vadd.f32 %v1278, %v1282
        %v1284 = vsel %vm203, %v1283, 0.0
        %1285 = vadd.xlane.f32.xlu0 %v1284
        %v1286 = vpop.xlane.xlu0 %1285
        %v1287 = vmul.f32 %v1286, %v207
        %v1288 = vsub.f32 %v1283, %v1287
        %v1289 = vmul.f32 %v1288, %v1288
        %v1290 = vsel %vm203, %v1289, 0.0
        %1291 = vadd.xlane.f32.xlu0 %v1290
        %v1292 = vpop.xlane.xlu0 %1291
        %v1293 = vmul.f32 %v1292, %v207
        %v1294 = vadd.f32 %v1293, 1e-05
        %v1295 = vrsqrt.pop %v1294
        %v1296 = vmul.f32 %v1288, %v1295
        %v1297 = vlaneseq
        %v1298 = vshrl.u32 %v1297, 7
        %v1299 = vsub.s32 2, %v1298
        %v1300 = vrot.slane %v202, %v1299
        %v1301 = vmul.f32 %v1296, %v1300
        %v1302 = vlaneseq
        %v1303 = vshrl.u32 %v1302, 7
        %v1304 = vsub.s32 3, %v1303
        %v1305 = vrot.slane %v202, %v1304
        %v1306 = vadd.f32 %v1301, %v1305
        %v1307 = vlaneseq
        %v1308 = vshrl.u32 %v1307, 7
        %v1309 = vsub.s32 7, %v1308
        %v1310 = vrot.slane %v202, %v1309
        %v1312 = vsel %vm203, %v1306, 0
        %1314 = vmatprep.subr.mxu0 0.0
        %1315 = vmatpush1.msra.mxu0 %v195
        %1316 = vmatprep.subr.mxu0 0.0
        %1317 = vmatpush1.msra.mxu0 %v197
        %1318 = vmatprep.subr.mxu0 0.0
        %1319 = vmatpush1.msra.mxu0 %v199
        %1320 = vmatprep.subr.mxu0 0.0
        %1321 = vmatpush1.msra.mxu0 %v201
        %1322 = vmatprep.subr.mxu0 0.0
        %1323 = vmatpush1.msra.mxu0 0.0
        %1324 = vmatprep.subr.mxu0 0.0
        %1325 = vmatpush1.msra.mxu0 0.0
        %1326 = vmatprep.subr.mxu0 0.0
        %1327 = vmatpush1.msra.mxu0 0.0
        %1328 = vmatprep.subr.mxu0 0.0
        %1329 = vmatpush1.msra.mxu0 0.0
        %1330 = vmatprep.subr.mxu0 0.0
        %1331 = vmatpush1.msra.mxu0 0.0
        %1332 = vmatprep.subr.mxu0 0.0
        %1333 = vmatpush1.msra.mxu0 0.0
        %1334 = vmatprep.subr.mxu0 0.0
        %1335 = vmatpush1.msra.mxu0 0.0
        %1336 = vmatprep.subr.mxu0 0.0
        %1337 = vmatpush1.msra.mxu0 0.0
        %1338 = vmatprep.subr.mxu0 0.0
        %1339 = vmatpush1.msra.mxu0 0.0
        %1340 = vmatprep.subr.mxu0 0.0
        %1341 = vmatpush1.msra.mxu0 0.0
        %1342 = vmatprep.subr.mxu0 0.0
        %1343 = vmatpush1.msra.mxu0 0.0
        %1344 = vmatprep.subr.mxu0 0.0
        %1345 = vmatpush1.msra.mxu0 0.0
        %1346 = vmatprep.subr.mxu0 0.0
        %1347 = vmatpush1.msra.mxu0 0.0
        %1348 = vmatprep.subr.mxu0 0.0
        %1349 = vmatpush1.msra.mxu0 0.0
        %1350 = vmatprep.subr.mxu0 0.0
        %1351 = vmatpush1.msra.mxu0 0.0
        %1352 = vmatprep.subr.mxu0 0.0
        %1353 = vmatpush1.msra.mxu0 0.0
        %1354 = vmatprep.subr.mxu0 0.0
        %1355 = vmatpush1.msra.mxu0 0.0
        %1356 = vmatprep.subr.mxu0 0.0
        %1357 = vmatpush1.msra.mxu0 0.0
        %1358 = vmatprep.subr.mxu0 0.0
        %1359 = vmatpush1.msra.mxu0 0.0
        %1360 = vmatprep.subr.mxu0 0.0
        %1361 = vmatpush1.msra.mxu0 0.0
        %1362 = vmatprep.subr.mxu0 0.0
        %1363 = vmatpush1.msra.mxu0 0.0
        %1364 = vmatprep.subr.mxu0 0.0
        %1365 = vmatpush1.msra.mxu0 0.0
        %1366 = vmatprep.subr.mxu0 0.0
        %1367 = vmatpush1.msra.mxu0 0.0
        %1368 = vmatprep.subr.mxu0 0.0
        %1369 = vmatpush1.msra.mxu0 0.0
        %1370 = vmatprep.subr.mxu0 0.0
        %1371 = vmatpush1.msra.mxu0 0.0
        %1372 = vmatprep.subr.mxu0 0.0
        %1373 = vmatpush1.msra.mxu0 0.0
        %1374 = vmatprep.subr.mxu0 0.0
        %1375 = vmatpush1.msra.mxu0 0.0
        %1376 = vmatprep.subr.mxu0 0.0
        %1377 = vmatpush1.msra.mxu0 0.0
        %1378 = vmatprep.mubr.f32.mxu0 0.0
        %1379 = vmatmul.mubr.f32.gmra.mrb[0].mxu0 %v1312
        %v1380 = vpop.f32.mrb[0].mxu0
        %v1381 = vadd.f32 %v1310, %v1380
        %v1382 = vpop.f32.mrb[0].mxu0
        %1383 = vdwg.mxu0
        %v1384 = vmul.f32 %v1381, 0.5
        %v1385 = vmul.f32 %v1381, 0.70710677
        %v1386 = verf.f32.pop %v1385
        %v1387 = vadd.f32 %v1386, 1.0
        %v1388 = vmul.f32 %v1384, %v1387
        %v1389 = vld [vmem:[%s2] sm:$0xff]
        %v1390 = vld [vmem:[%s2 + $0x8] sm:$0xff]
        %v1391 = vld [vmem:[%s2 + $0x10] sm:$0xff]
        %v1392 = vld [vmem:[%s2 + $0x18] sm:$0xff]
        %v1393 = vld [vmem:[%s2 + $0x20] sm:$0xff]
        %v1394 = vld [vmem:[%s2 + $0x28] sm:$0xff]
        %v1395 = vld [vmem:[%s2 + $0x30] sm:$0xff]
        %v1396 = vld [vmem:[%s2 + $0x38] sm:$0xff]
        %v1397 = vld [vmem:[%s2 + $0x40] sm:$0xff]
        %v1398 = vld [vmem:[%s2 + $0x48] sm:$0xff]
        %v1399 = vld [vmem:[%s2 + $0x50] sm:$0xff]
        %v1400 = vld [vmem:[%s2 + $0x58] sm:$0xff]
        %v1401 = vld [vmem:[%s2 + $0x60] sm:$0xff]
        %v1402 = vld [vmem:[%s2 + $0x68] sm:$0xff]
        %v1403 = vld [vmem:[%s2 + $0x70] sm:$0xff]
        %v1404 = vld [vmem:[%s2 + $0x78] sm:$0xff]
        %v1405 = vlaneseq
        %v1406 = vshrl.u32 %v1405, 7
        %v1407 = vsub.s32 5, %v1406
        %v1408 = vrot.slane %v202, %v1407
        %1409 = vmatprep.subr.mxu0 0.0
        %1410 = vmatpush1.msra.mxu0 %v1389
        %1411 = vmatprep.subr.mxu0 0.0
        %1412 = vmatpush1.msra.mxu0 %v1390
        %1413 = vmatprep.subr.mxu0 0.0
        %1414 = vmatpush1.msra.mxu0 %v1391
        %1415 = vmatprep.subr.mxu0 0.0
        %1416 = vmatpush1.msra.mxu0 %v1392
        %1417 = vmatprep.subr.mxu0 0.0
        %1418 = vmatpush1.msra.mxu0 %v1393
        %1419 = vmatprep.subr.mxu0 0.0
        %1420 = vmatpush1.msra.mxu0 %v1394
        %1421 = vmatprep.subr.mxu0 0.0
        %1422 = vmatpush1.msra.mxu0 %v1395
        %1423 = vmatprep.subr.mxu0 0.0
        %1424 = vmatpush1.msra.mxu0 %v1396
        %1425 = vmatprep.subr.mxu0 0.0
        %1426 = vmatpush1.msra.mxu0 %v1397
        %1427 = vmatprep.subr.mxu0 0.0
        %1428 = vmatpush1.msra.mxu0 %v1398
        %1429 = vmatprep.subr.mxu0 0.0
        %1430 = vmatpush1.msra.mxu0 %v1399
        %1431 = vmatprep.subr.mxu0 0.0
        %1432 = vmatpush1.msra.mxu0 %v1400
        %1433 = vmatprep.subr.mxu0 0.0
        %1434 = vmatpush1.msra.mxu0 %v1401
        %1435 = vmatprep.subr.mxu0 0.0
        %1436 = vmatpush1.msra.mxu0 %v1402
        %1437 = vmatprep.subr.mxu0 0.0
        %1438 = vmatpush1.msra.mxu0 %v1403
        %1439 = vmatprep.subr.mxu0 0.0
        %1440 = vmatpush1.msra.mxu0 %v1404
        %1441 = vmatprep.subr.mxu0 0.0
        %1442 = vmatpush1.msra.mxu0 0.0
        %1443 = vmatprep.subr.mxu0 0.0
        %1444 = vmatpush1.msra.mxu0 0.0
        %1445 = vmatprep.subr.mxu0 0.0
        %1446 = vmatpush1.msra.mxu0 0.0
        %1447 = vmatprep.subr.mxu0 0.0
        %1448 = vmatpush1.msra.mxu0 0.0
        %1449 = vmatprep.subr.mxu0 0.0
        %1450 = vmatpush1.msra.mxu0 0.0
        %1451 = vmatprep.subr.mxu0 0.0
        %1452 = vmatpush1.msra.mxu0 0.0
        %1453 = vmatprep.subr.mxu0 0.0
        %1454 = vmatpush1.msra.mxu0 0.0
        %1455 = vmatprep.subr.mxu0 0.0
        %1456 = vmatpush1.msra.mxu0 0.0
        %1457 = vmatprep.subr.mxu0 0.0
        %1458 = vmatpush1.msra.mxu0 0.0
        %1459 = vmatprep.subr.mxu0 0.0
        %1460 = vmatpush1.msra.mxu0 0.0
        %1461 = vmatprep.subr.mxu0 0.0
        %1462 = vmatpush1.msra.mxu0 0.0
        %1463 = vmatprep.subr.mxu0 0.0
        %1464 = vmatpush1.msra.mxu0 0.0
        %1465 = vmatprep.subr.mxu0 0.0
        %1466 = vmatpush1.msra.mxu0 0.0
        %1467 = vmatprep.subr.mxu0 0.0
        %1468 = vmatpush1.msra.mxu0 0.0
        %1469 = vmatprep.subr.mxu0 0.0
        %1470 = vmatpush1.msra.mxu0 0.0
        %1471 = vmatprep.subr.mxu0 0.0
        %1472 = vmatpush1.msra.mxu0 0.0
        %1473 = vmatprep.mubr.f32.mxu0 0.0
        %1474 = vmatmul.mubr.f32.gmra.mrb[0].mxu0 %v1388
        %v1475 = vpop.f32.mrb[0].mxu0
        %v1476 = vadd.f32 %v1408, %v1475
        %v1477 = vpop.f32.mrb[0].mxu0
        %1478 = vdwg.mxu0
        %v1479 = vadd.f32 %v193, %v1476
        %1480 = vst.msk [vmem:[%s188] sm:$0xff] %vm203, %v1479
        %s1481 = sand.u32 %s115, 1
        %s1482 = scalar_lea.sflag [#allocation3], %s1481
        %s1483 = sand.u32 %s115, 1
        %s1484 = smul.addr %s1483, 8
        %s1485 = scalar_lea.vmem [#allocation2], %s1484
        // Predicated region
        $region37: #{tpu_custom_call.1} parent=35 // pred_check
          %p1486 = pneg %p125
        $region38: #{tpu_custom_call.1} parent=35 // pred_check_branch
          %1488 = sbr.rel (%p1486) target = $region40
        $region39: #{tpu_custom_call.1} parent=35 // pred_region
          %s1490 = ssub.s32 128, 128
          %1491 = vsyncadd %s1482, %s1490
          %s1492 = smul.addr %s18, 128
          %s1493 = scalar_lea.hbm %s4, %s1492
          %s1495 = sshll.u32 %s1485, 4
          %s1496 = int_to_ptr.vmem [resolvable:$true] %s1495
          %1498 = dma.vmem_to_hbm [thread:$0]  %s1496, 128, %s1493, %s1482
        $region40: #{tpu_custom_call.1} parent=35 // pred_fallthru
          _
      $region36: #{tpu_custom_call.1} parent=5 // pred_fallthru
        _
      %p1499 = scmp.le.s32.totalorder 2, %s13
      // Predicated region
      $region41: #{tpu_custom_call.1} parent=5 // pred_check
        %p1500 = pneg %p1499
      $region42: #{tpu_custom_call.1} parent=5 // pred_check_branch
        %1502 = sbr.rel (%p1500) target = $region44
      $region43: #{tpu_custom_call.1} parent=5 // pred_region
        %s1503 = ssub.s32 %s13, 2
        // Predicated region
        $region45: #{tpu_custom_call.1} parent=43 // pred_check
          %p1504 = pneg %p131
        $region46: #{tpu_custom_call.1} parent=43 // pred_check_branch
          %1506 = sbr.rel (%p1504) target = $region48
        $region47: #{tpu_custom_call.1} parent=43 // pred_region
          %s1507 = sand.u32 %s116, 1
          %s1508 = scalar_lea.sflag [#allocation3], %s1507
          %s1509 = sand.u32 %s116, 1
          %s1510 = smul.addr %s1509, 8
          %s1511 = scalar_lea.vmem [#allocation2], %s1510
          %1512 = dma.done %s1508, 128
        $region48: #{tpu_custom_call.1} parent=43 // pred_fallthru
          _
      $region44: #{tpu_custom_call.1} parent=5 // pred_fallthru
        _
    $region6: #{tpu_custom_call.1} parent=1 // loop_footer
      %s17 = sadd.s32 1, %s13
    $region7: #{tpu_custom_call.1} parent=1 // loop_footer_branch
      %12 = sbr.rel target = $region3
    $region8: #{tpu_custom_call.1} parent=1 // loop_exit
      _
    %1513 = vsyncpa [#allocation3], 1
    %s1514 = scalar_lea.sflag [#allocation3], 1
    %1515 = vsyncpa %s1514, 1

</llo_original>
